<compile_context>
chip_gen: v5e
topology: v5e:2x2
jax: 0.10.0
libtpu: 0.0.40
codegen_flags: <defaults>
</compile_context>

<pallas_src>
import functools
import math

import jax
import jax.numpy as jnp
from jax.experimental import pallas as pl
from jax.experimental.pallas import tpu as pltpu

EPS = 1e-5


def _residual_block_kernel(x_ref, w1_ref, b1_ref, g1_ref, be1_ref,
                           w2_ref, b2_ref, g2_ref, be2_ref,
                           out_ref, pad_ref, col_ref,
                           *, N, C, H, W, S, S_pad, M, inv_count):
    C_pad = pad_ref.shape[0]
    Hs = H + 2                      # rows per image incl. one zero row above/below
    HW = H * W
    blk = Hs * W                    # flat lanes per padded image block

    # ---- masks generated in-kernel from iota (no host mask input) ----------
    s_idx = jax.lax.broadcasted_iota(jnp.int32, (1, S_pad), 1)
    col = s_idx % W                                  # output column within a row
    in_rows = s_idx < 0                              # all-False, built per image
    for n in range(N):                               # N is small & static
        lo = n * blk + W                             # first lane of image n row 1
        hi = n * blk + (H + 1) * W                   # one past last lane of row H
        in_rows = in_rows | ((s_idx >= lo) & (s_idx < hi))
    valid = (in_rows & (s_idx < S)).astype(jnp.float32)     # (1, S_pad)
    mask_l = (col > 0).astype(jnp.float32)           # kw==0 taps invalid at col 0
    mask_r = (col < W - 1).astype(jnp.float32)       # kw==2 taps invalid at col W-1

    # ---- assemble zero-padded channel-major flat input in VMEM -------------
    # pad_ref layout: [left margin M | interior S_pad | right margin M]; M and
    # S_pad are multiples of 128.  Zero once; the interior is fully overwritten
    # before each conv, margins / padding rows / lane tail stay zero.
    pad_ref[...] = jnp.zeros_like(pad_ref)
    for n in range(N):                               # per-image contiguous interior
        pad_ref[:C, pl.ds(M + n * blk + W, HW)] = x_ref[n]
    x_flat = pad_ref[:, pl.ds(M, S_pad)]             # (C_pad, S_pad); zero at pads

    # ---- training-mode BatchNorm (batch stats, biased var) + ReLU ----------
    def bn_relu(v, g, b, pre_masked):
        vm = v if pre_masked else v * valid
        mean = jnp.sum(vm, axis=1, keepdims=True) * inv_count          # (C_pad, 1)
        centered = (v - mean) * valid                                  # two-pass var
        var = jnp.sum(centered * centered, axis=1, keepdims=True) * inv_count
        inv = jax.lax.rsqrt(var + EPS)                                 # EUP
        a = (v - mean) * (inv * g) + b
        return jnp.maximum(a, 0.0) * valid           # keep padding positions zero

    # ---- im2col 3x3 conv -----------------------------------------------------
    # Flat shift of tap (kh, kw) is (kh-1)*W + (kw-1).  kh shifts land on zero
    # padding rows; kw=+/-1 shifts wrapping across a row boundary are zeroed by
    # the column masks.  Each tap block of col_ref is C_pad (multiple of 8)
    # sublanes starting at k*C_pad -> aligned, unmasked full-tile stores.
    taps = tuple(((kh - 1) * W + (kw - 1), (mask_l, None, mask_r)[kw])
                 for kh in range(3) for kw in range(3))

    def build_im2col():
        for k, (shift, cmask) in enumerate(taps):
            sl = pad_ref[:, pl.ds(M + shift, S_pad)]
            if cmask is not None:
                sl = sl * cmask
            col_ref[k * C_pad:(k + 1) * C_pad, :] = sl

    def conv3x3(w_ref, b_ref):
        # Single fused MXU matmul per conv: (C_pad, 9*C_pad) @ (9*C_pad, S_pad).
        y = jnp.dot(w_ref[...], col_ref[...], preferred_element_type=jnp.float32)
        return y + b_ref[...]                        # bias added once, post-matmul

    # --- BN1 + ReLU -> conv1 ---
    a1 = bn_relu(x_flat, g1_ref[...], be1_ref[...], pre_masked=True)
    pad_ref[:, pl.ds(M, S_pad)] = a1                 # lane-aligned full store
    build_im2col()
    y1 = conv3x3(w1_ref, b1_ref)

    # --- BN2 + ReLU -> conv2 ---
    a2 = bn_relu(y1, g2_ref[...], be2_ref[...], pre_masked=False)
    pad_ref[:, pl.ds(M, S_pad)] = a2
    build_im2col()
    y2 = conv3x3(w2_ref, b2_ref)

    # --- residual add, scattered back to the (N, C, H*W) output layout ---
    for n in range(N):
        start = n * blk + W
        out_ref[n] = x_ref[n] + y2[:C, start:start + HW]


def residual_block_forward(x, params):
    """x: (N, C, H, W) float32 (PyTorch NCHW convention)."""
    N, C, H, W = x.shape
    C_pad = ((C + 7) // 8) * 8                       # f32 sublane tile
    Hs = H + 2                                       # one zero row above/below image
    HW = H * W
    S = N * Hs * W                                   # row-padded flat spatial extent
    S_pad = ((S + 127) // 128) * 128                 # lane-aligned
    M = ((W + 1 + 127) // 128) * 128                 # halo margin >= W+1, lane-aligned
    inv_count = 1.0 / float(N * H * W)

    w1, b1, g1, be1, w2, b2, g2, be2 = params

    def im2col_weights(w):
        # (C_out, C_in, 3, 3) -> (C_pad, 9*C_pad), tap-major column blocks of
        # C_pad with zero rows/cols for channel padding (matches in-kernel im2col).
        wt = jnp.transpose(w, (2, 3, 0, 1))                          # (3,3,Co,Ci)
        wt = jnp.pad(wt, ((0, 0), (0, 0), (0, C_pad - C), (0, C_pad - C)))
        return jnp.transpose(wt, (2, 0, 1, 3)).reshape(C_pad, 9 * C_pad)

    def cvec(v):
        return jnp.pad(v.reshape(C, 1), ((0, C_pad - C), (0, 0)))

    # Only host-side data glue: contiguous trailing-dim collapse (no pad, no
    # transpose); zero padding and layout transform happen inside the kernel.
    x3 = x.reshape(N, C, HW)

    args = (x3,
            im2col_weights(w1), cvec(b1), cvec(g1), cvec(be1),
            im2col_weights(w2), cvec(b2), cvec(g2), cvec(be2))

    scratch_shapes = [
        pltpu.VMEM((C_pad, S_pad + 2 * M), jnp.float32),   # padded activation
        pltpu.VMEM((9 * C_pad, S_pad), jnp.float32),       # im2col (aligned tap blocks)
    ]
    # TODO(synk): at production sizes replace the 9x im2col scratch with a
    # lane-tiled / per-tap accumulating conv so it fits v7x's 64 MiB VMEM.

    # VMEM budget: actual in/out/scratch + 25% + fixed slack for compiler
    # temporaries, clamped to ~80% of physical per-core VMEM (64 MiB on v7x).
    io_bytes = 4 * (sum(math.prod(a.shape) for a in args) + N * C * HW)
    alloc_bytes = io_bytes + 4 * (C_pad * (S_pad + 2 * M) + 9 * C_pad * S_pad)
    try:
        vmem_cap = pltpu.get_tpu_info().vmem_capacity_bytes
    except Exception:
        vmem_cap = 64 * 1024 * 1024                   # conservative (v7x) fallback
    vmem_limit = min(int(0.8 * vmem_cap),
                     max(4 * 1024 * 1024, int(1.25 * alloc_bytes) + (2 << 20)))

    cost = pl.CostEstimate(
        flops=2 * (2 * C_pad * (9 * C_pad) * S_pad) + 2 * 12 * C_pad * S_pad,
        transcendentals=2 * C_pad,
        bytes_accessed=int(io_bytes))

    kernel = functools.partial(_residual_block_kernel,
                               N=N, C=C, H=H, W=W, S=S, S_pad=S_pad, M=M,
                               inv_count=inv_count)

    out3 = pl.pallas_call(
        kernel,
        out_shape=jax.ShapeDtypeStruct((N, C, HW), jnp.float32),
        in_specs=[pl.BlockSpec(memory_space=pltpu.MemorySpace.VMEM)] * len(args),
        out_specs=pl.BlockSpec(memory_space=pltpu.MemorySpace.VMEM),
        scratch_shapes=scratch_shapes,
        compiler_params=pltpu.CompilerParams(vmem_limit_bytes=int(vmem_limit)),
        cost_estimate=cost,
    )(*args)

    # TODO(synk): production path = 3-call pipeline with a spatially tiled
    # "parallel" grid (uses both v7x TensorCores) + bf16 MXU operands on v6e/v7x.
    return out3.reshape(N, C, H, W)


def reference(x, params):
    """Pure-JAX reference of the PyTorch forward (training-mode BN)."""
    w1, b1, g1, be1, w2, b2, g2, be2 = params

    def bn_relu(v, g, b):
        mean = v.mean(axis=(0, 2, 3), keepdims=True)
        var = v.var(axis=(0, 2, 3), keepdims=True)          # biased variance
        a = (v - mean) / jnp.sqrt(var + EPS)
        a = a * g.reshape(1, -1, 1, 1) + b.reshape(1, -1, 1, 1)
        return jnp.maximum(a, 0.0)

    def conv(v, w, b):
        y = jax.lax.conv_general_dilated(
            v, w, window_strides=(1, 1), padding='SAME',
            dimension_numbers=('NCHW', 'OIHW', 'NCHW'))
        return y + b.reshape(1, -1, 1, 1)

    y = conv(bn_relu(x, g1, be1), w1, b1)
    y = conv(bn_relu(y, g2, be2), w2, b2)
    return x + y


if __name__ == "__main__":
    N, C, H, W = 2, 4, 16, 16
    key = jax.random.PRNGKey(0)
    ks = jax.random.split(key, 9)

    x = jax.random.normal(ks[0], (N, C, H, W), jnp.float32)
    # Deterministic synthetic parameters (Conv2d weights/biases, BN affine).
    w1 = 0.1 * jax.random.normal(ks[1], (C, C, 3, 3), jnp.float32)
    b1 = 0.1 * jax.random.normal(ks[2], (C,), jnp.float32)
    g1 = 1.0 + 0.1 * jax.random.normal(ks[3], (C,), jnp.float32)
    be1 = 0.1 * jax.random.normal(ks[4], (C,), jnp.float32)
    w2 = 0.1 * jax.random.normal(ks[5], (C, C, 3, 3), jnp.float32)
    b2 = 0.1 * jax.random.normal(ks[6], (C,), jnp.float32)
    g2 = 1.0 + 0.1 * jax.random.normal(ks[7], (C,), jnp.float32)
    be2 = 0.1 * jax.random.normal(ks[8], (C,), jnp.float32)
    params = (w1, b1, g1, be1, w2, b2, g2, be2)

    out = residual_block_forward(x, params)
    out = jax.block_until_ready(out)

    ref = jax.block_until_ready(reference(x, params))
    assert out.shape == (N, C, H, W)
    assert jnp.allclose(out, ref, atol=1e-4, rtol=1e-4), float(
        jnp.max(jnp.abs(out - ref)))

    print("KERNEL_OK")
</pallas_src>

<mosaic_0001>
module attributes {stable_mosaic.version = 11 : i64} {
  func.func @_residual_block_kernel(%arg0: memref<2x4x256xf32, #tpu.memory_space<vmem>>, %arg1: memref<8x72xf32, #tpu.memory_space<vmem>>, %arg2: memref<8x1xf32, #tpu.memory_space<vmem>>, %arg3: memref<8x1xf32, #tpu.memory_space<vmem>>, %arg4: memref<8x1xf32, #tpu.memory_space<vmem>>, %arg5: memref<8x72xf32, #tpu.memory_space<vmem>>, %arg6: memref<8x1xf32, #tpu.memory_space<vmem>>, %arg7: memref<8x1xf32, #tpu.memory_space<vmem>>, %arg8: memref<8x1xf32, #tpu.memory_space<vmem>>, %arg9: memref<2x4x256xf32, #tpu.memory_space<vmem>>, %arg10: memref<8x896xf32, #tpu.memory_space<vmem>>, %arg11: memref<72x640xf32, #tpu.memory_space<vmem>>) attributes {dimension_semantics = [], scalar_prefetch = 0 : i64, scratch_operands = 2 : i64, tpu.core_type = #tpu.core_type<tc>} {
    %0 = tpu.iota {dimensions = array<i32: 1>} : vector<1x640xi32>
    %c16_i32 = arith.constant 16 : i32
    %c0_i32 = arith.constant 0 : i32
    %1 = arith.cmpi eq, %c16_i32, %c0_i32 : i32
    %c1_i32 = arith.constant 1 : i32
    %2 = arith.select %1, %c1_i32, %c16_i32 : i32
    %3 = vector.broadcast %2 : i32 to vector<1x640xi32>
    %4 = arith.remsi %0, %3 : vector<1x640xi32>
    %c0_i32_0 = arith.constant 0 : i32
    %5 = vector.broadcast %c0_i32_0 : i32 to vector<1x640xi32>
    %6 = arith.cmpi ne, %4, %5 : vector<1x640xi32>
    %c0_i32_1 = arith.constant 0 : i32
    %7 = vector.broadcast %c0_i32_1 : i32 to vector<1x640xi32>
    %8 = arith.cmpi slt, %4, %7 : vector<1x640xi32>
    %c0_i32_2 = arith.constant 0 : i32
    %9 = arith.cmpi slt, %2, %c0_i32_2 : i32
    %10 = vector.broadcast %9 : i1 to vector<1x640xi1>
    %11 = vector.broadcast %10 : vector<1x640xi1> to vector<1x640xi1>
    %12 = arith.xori %8, %11 : vector<1x640xi1>
    %13 = arith.andi %12, %6 : vector<1x640xi1>
    %14 = vector.broadcast %2 : i32 to vector<1x640xi32>
    %15 = arith.addi %4, %14 : vector<1x640xi32>
    %16 = arith.select %13, %15, %4 : vector<1x640xi1>, vector<1x640xi32>
    %c0_i32_3 = arith.constant 0 : i32
    %17 = vector.broadcast %c0_i32_3 : i32 to vector<1x640xi32>
    %18 = arith.cmpi slt, %0, %17 : vector<1x640xi32>
    %c16_i32_4 = arith.constant 16 : i32
    %19 = vector.broadcast %c16_i32_4 : i32 to vector<1x640xi32>
    %20 = arith.cmpi sge, %0, %19 : vector<1x640xi32>
    %c272_i32 = arith.constant 272 : i32
    %21 = vector.broadcast %c272_i32 : i32 to vector<1x640xi32>
    %22 = arith.cmpi slt, %0, %21 : vector<1x640xi32>
    %23 = arith.andi %20, %22 : vector<1x640xi1>
    %24 = arith.ori %18, %23 : vector<1x640xi1>
    %c304_i32 = arith.constant 304 : i32
    %25 = vector.broadcast %c304_i32 : i32 to vector<1x640xi32>
    %26 = arith.cmpi sge, %0, %25 : vector<1x640xi32>
    %c560_i32 = arith.constant 560 : i32
    %27 = vector.broadcast %c560_i32 : i32 to vector<1x640xi32>
    %28 = arith.cmpi slt, %0, %27 : vector<1x640xi32>
    %29 = arith.andi %26, %28 : vector<1x640xi1>
    %30 = arith.ori %24, %29 : vector<1x640xi1>
    %c576_i32 = arith.constant 576 : i32
    %31 = vector.broadcast %c576_i32 : i32 to vector<1x640xi32>
    %32 = arith.cmpi slt, %0, %31 : vector<1x640xi32>
    %33 = arith.andi %30, %32 : vector<1x640xi1>
    %34 = arith.extui %33 : vector<1x640xi1> to vector<1x640xi32>
    %35 = arith.sitofp %34 : vector<1x640xi32> to vector<1x640xf32>
    %c0_i32_5 = arith.constant 0 : i32
    %36 = vector.broadcast %c0_i32_5 : i32 to vector<1x640xi32>
    %37 = arith.cmpi sgt, %16, %36 : vector<1x640xi32>
    %38 = arith.extui %37 : vector<1x640xi1> to vector<1x640xi32>
    %39 = arith.sitofp %38 : vector<1x640xi32> to vector<1x640xf32>
    %c15_i32 = arith.constant 15 : i32
    %40 = vector.broadcast %c15_i32 : i32 to vector<1x640xi32>
    %41 = arith.cmpi slt, %16, %40 : vector<1x640xi32>
    %42 = arith.extui %41 : vector<1x640xi1> to vector<1x640xi32>
    %43 = arith.sitofp %42 : vector<1x640xi32> to vector<1x640xf32>
    %cst = arith.constant 0.000000e+00 : f32
    %44 = vector.broadcast %cst : f32 to vector<8x896xf32>
    %c0 = arith.constant 0 : index
    %c0_6 = arith.constant 0 : index
    %45 = vector.load %arg10[%c0, %c0_6] : memref<8x896xf32, #tpu.memory_space<vmem>>, vector<8x896xf32>
    tpu.vector_store %arg10[%c0, %c0_6], %44 {strides = array<i32>} : memref<8x896xf32, #tpu.memory_space<vmem>>, vector<8x896xf32>,
    %c0_7 = arith.constant 0 : index
    %c0_8 = arith.constant 0 : index
    %c0_9 = arith.constant 0 : index
    %46 = vector.load %arg0[%c0_7, %c0_8, %c0_9] : memref<2x4x256xf32, #tpu.memory_space<vmem>>, vector<1x4x256xf32>
    %47 = vector.shape_cast %46 : vector<1x4x256xf32> to vector<4x256xf32>
    %c0_10 = arith.constant 0 : index
    %c144 = arith.constant 144 : index
    %48 = vector.load %arg10[%c0_10, %c144] : memref<8x896xf32, #tpu.memory_space<vmem>>, vector<4x256xf32>
    tpu.vector_store %arg10[%c0_10, %c144], %47 {strides = array<i32>} : memref<8x896xf32, #tpu.memory_space<vmem>>, vector<4x256xf32>,
    %c1 = arith.constant 1 : index
    %c0_11 = arith.constant 0 : index
    %c0_12 = arith.constant 0 : index
    %49 = vector.load %arg0[%c1, %c0_11, %c0_12] : memref<2x4x256xf32, #tpu.memory_space<vmem>>, vector<1x4x256xf32>
    %50 = vector.shape_cast %49 : vector<1x4x256xf32> to vector<4x256xf32>
    %c0_13 = arith.constant 0 : index
    %c432 = arith.constant 432 : index
    %51 = vector.load %arg10[%c0_13, %c432] : memref<8x896xf32, #tpu.memory_space<vmem>>, vector<4x256xf32>
    tpu.vector_store %arg10[%c0_13, %c432], %50 {strides = array<i32>} : memref<8x896xf32, #tpu.memory_space<vmem>>, vector<4x256xf32>,
    %c0_14 = arith.constant 0 : index
    %c128 = arith.constant 128 : index
    %52 = vector.load %arg10[%c0_14, %c128] : memref<8x896xf32, #tpu.memory_space<vmem>>, vector<8x640xf32>
    %c0_15 = arith.constant 0 : index
    %c0_16 = arith.constant 0 : index
    %53 = vector.load %arg3[%c0_15, %c0_16] : memref<8x1xf32, #tpu.memory_space<vmem>>, vector<8x1xf32>
    %c0_17 = arith.constant 0 : index
    %c0_18 = arith.constant 0 : index
    %54 = vector.load %arg4[%c0_17, %c0_18] : memref<8x1xf32, #tpu.memory_space<vmem>>, vector<8x1xf32>
    %cst_19 = arith.constant dense<0.000000e+00> : vector<8xf32>
    %55 = vector.multi_reduction <add>, %52, %cst_19 [1] : vector<8x640xf32> to vector<8xf32>
    %56 = vector.shape_cast %55 : vector<8xf32> to vector<8x1xf32>
    %cst_20 = arith.constant 0.001953125 : f32
    %57 = vector.broadcast %cst_20 : f32 to vector<8x1xf32>
    %58 = arith.mulf %56, %57 : vector<8x1xf32>
    %59 = vector.broadcast %58 : vector<8x1xf32> to vector<8x640xf32>
    %60 = arith.subf %52, %59 : vector<8x640xf32>
    %61 = vector.broadcast %35 : vector<1x640xf32> to vector<8x640xf32>
    %62 = arith.mulf %60, %61 : vector<8x640xf32>
    %63 = arith.mulf %62, %62 : vector<8x640xf32>
    %cst_21 = arith.constant dense<0.000000e+00> : vector<8xf32>
    %64 = vector.multi_reduction <add>, %63, %cst_21 [1] : vector<8x640xf32> to vector<8xf32>
    %65 = vector.shape_cast %64 : vector<8xf32> to vector<8x1xf32>
    %cst_22 = arith.constant 0.001953125 : f32
    %66 = vector.broadcast %cst_22 : f32 to vector<8x1xf32>
    %67 = arith.mulf %65, %66 : vector<8x1xf32>
    %cst_23 = arith.constant 9.99999974E-6 : f32
    %68 = vector.broadcast %cst_23 : f32 to vector<8x1xf32>
    %69 = arith.addf %67, %68 : vector<8x1xf32>
    %70 = math.rsqrt %69 : vector<8x1xf32>
    %71 = vector.broadcast %58 : vector<8x1xf32> to vector<8x640xf32>
    %72 = arith.subf %52, %71 : vector<8x640xf32>
    %73 = arith.mulf %70, %53 : vector<8x1xf32>
    %74 = vector.broadcast %73 : vector<8x1xf32> to vector<8x640xf32>
    %75 = arith.mulf %72, %74 : vector<8x640xf32>
    %76 = vector.broadcast %54 : vector<8x1xf32> to vector<8x640xf32>
    %77 = arith.addf %75, %76 : vector<8x640xf32>
    %cst_24 = arith.constant 0.000000e+00 : f32
    %78 = vector.broadcast %cst_24 : f32 to vector<8x640xf32>
    %79 = arith.maximumf %77, %78 : vector<8x640xf32>
    %80 = vector.broadcast %35 : vector<1x640xf32> to vector<8x640xf32>
    %81 = arith.mulf %79, %80 : vector<8x640xf32>
    %c0_25 = arith.constant 0 : index
    %c128_26 = arith.constant 128 : index
    %82 = vector.load %arg10[%c0_25, %c128_26] : memref<8x896xf32, #tpu.memory_space<vmem>>, vector<8x640xf32>
    tpu.vector_store %arg10[%c0_25, %c128_26], %81 {strides = array<i32>} : memref<8x896xf32, #tpu.memory_space<vmem>>, vector<8x640xf32>,
    %c0_27 = arith.constant 0 : index
    %c111 = arith.constant 111 : index
    %83 = vector.load %arg10[%c0_27, %c111] : memref<8x896xf32, #tpu.memory_space<vmem>>, vector<8x640xf32>
    %84 = vector.broadcast %39 : vector<1x640xf32> to vector<8x640xf32>
    %85 = arith.mulf %83, %84 : vector<8x640xf32>
    %c0_28 = arith.constant 0 : index
    %c0_29 = arith.constant 0 : index
    %86 = vector.load %arg11[%c0_28, %c0_29] : memref<72x640xf32, #tpu.memory_space<vmem>>, vector<8x640xf32>
    tpu.vector_store %arg11[%c0_28, %c0_29], %85 {strides = array<i32>} : memref<72x640xf32, #tpu.memory_space<vmem>>, vector<8x640xf32>,
    %c0_30 = arith.constant 0 : index
    %c112 = arith.constant 112 : index
    %87 = vector.load %arg10[%c0_30, %c112] : memref<8x896xf32, #tpu.memory_space<vmem>>, vector<8x640xf32>
    %c8 = arith.constant 8 : index
    %c0_31 = arith.constant 0 : index
    %88 = vector.load %arg11[%c8, %c0_31] : memref<72x640xf32, #tpu.memory_space<vmem>>, vector<8x640xf32>
    tpu.vector_store %arg11[%c8, %c0_31], %87 {strides = array<i32>} : memref<72x640xf32, #tpu.memory_space<vmem>>, vector<8x640xf32>,
    %c0_32 = arith.constant 0 : index
    %c113 = arith.constant 113 : index
    %89 = vector.load %arg10[%c0_32, %c113] : memref<8x896xf32, #tpu.memory_space<vmem>>, vector<8x640xf32>
    %90 = vector.broadcast %43 : vector<1x640xf32> to vector<8x640xf32>
    %91 = arith.mulf %89, %90 : vector<8x640xf32>
    %c16 = arith.constant 16 : index
    %c0_33 = arith.constant 0 : index
    %92 = vector.load %arg11[%c16, %c0_33] : memref<72x640xf32, #tpu.memory_space<vmem>>, vector<8x640xf32>
    tpu.vector_store %arg11[%c16, %c0_33], %91 {strides = array<i32>} : memref<72x640xf32, #tpu.memory_space<vmem>>, vector<8x640xf32>,
    %c0_34 = arith.constant 0 : index
    %c127 = arith.constant 127 : index
    %93 = vector.load %arg10[%c0_34, %c127] : memref<8x896xf32, #tpu.memory_space<vmem>>, vector<8x640xf32>
    %94 = vector.broadcast %39 : vector<1x640xf32> to vector<8x640xf32>
    %95 = arith.mulf %93, %94 : vector<8x640xf32>
    %c24 = arith.constant 24 : index
    %c0_35 = arith.constant 0 : index
    %96 = vector.load %arg11[%c24, %c0_35] : memref<72x640xf32, #tpu.memory_space<vmem>>, vector<8x640xf32>
    tpu.vector_store %arg11[%c24, %c0_35], %95 {strides = array<i32>} : memref<72x640xf32, #tpu.memory_space<vmem>>, vector<8x640xf32>,
    %c0_36 = arith.constant 0 : index
    %c128_37 = arith.constant 128 : index
    %97 = vector.load %arg10[%c0_36, %c128_37] : memref<8x896xf32, #tpu.memory_space<vmem>>, vector<8x640xf32>
    %c32 = arith.constant 32 : index
    %c0_38 = arith.constant 0 : index
    %98 = vector.load %arg11[%c32, %c0_38] : memref<72x640xf32, #tpu.memory_space<vmem>>, vector<8x640xf32>
    tpu.vector_store %arg11[%c32, %c0_38], %97 {strides = array<i32>} : memref<72x640xf32, #tpu.memory_space<vmem>>, vector<8x640xf32>,
    %c0_39 = arith.constant 0 : index
    %c129 = arith.constant 129 : index
    %99 = vector.load %arg10[%c0_39, %c129] : memref<8x896xf32, #tpu.memory_space<vmem>>, vector<8x640xf32>
    %100 = vector.broadcast %43 : vector<1x640xf32> to vector<8x640xf32>
    %101 = arith.mulf %99, %100 : vector<8x640xf32>
    %c40 = arith.constant 40 : index
    %c0_40 = arith.constant 0 : index
    %102 = vector.load %arg11[%c40, %c0_40] : memref<72x640xf32, #tpu.memory_space<vmem>>, vector<8x640xf32>
    tpu.vector_store %arg11[%c40, %c0_40], %101 {strides = array<i32>} : memref<72x640xf32, #tpu.memory_space<vmem>>, vector<8x640xf32>,
    %c0_41 = arith.constant 0 : index
    %c143 = arith.constant 143 : index
    %103 = vector.load %arg10[%c0_41, %c143] : memref<8x896xf32, #tpu.memory_space<vmem>>, vector<8x640xf32>
    %104 = vector.broadcast %39 : vector<1x640xf32> to vector<8x640xf32>
    %105 = arith.mulf %103, %104 : vector<8x640xf32>
    %c48 = arith.constant 48 : index
    %c0_42 = arith.constant 0 : index
    %106 = vector.load %arg11[%c48, %c0_42] : memref<72x640xf32, #tpu.memory_space<vmem>>, vector<8x640xf32>
    tpu.vector_store %arg11[%c48, %c0_42], %105 {strides = array<i32>} : memref<72x640xf32, #tpu.memory_space<vmem>>, vector<8x640xf32>,
    %c0_43 = arith.constant 0 : index
    %c144_44 = arith.constant 144 : index
    %107 = vector.load %arg10[%c0_43, %c144_44] : memref<8x896xf32, #tpu.memory_space<vmem>>, vector<8x640xf32>
    %c56 = arith.constant 56 : index
    %c0_45 = arith.constant 0 : index
    %108 = vector.load %arg11[%c56, %c0_45] : memref<72x640xf32, #tpu.memory_space<vmem>>, vector<8x640xf32>
    tpu.vector_store %arg11[%c56, %c0_45], %107 {strides = array<i32>} : memref<72x640xf32, #tpu.memory_space<vmem>>, vector<8x640xf32>,
    %c0_46 = arith.constant 0 : index
    %c145 = arith.constant 145 : index
    %109 = vector.load %arg10[%c0_46, %c145] : memref<8x896xf32, #tpu.memory_space<vmem>>, vector<8x640xf32>
    %110 = vector.broadcast %43 : vector<1x640xf32> to vector<8x640xf32>
    %111 = arith.mulf %109, %110 : vector<8x640xf32>
    %c64 = arith.constant 64 : index
    %c0_47 = arith.constant 0 : index
    %112 = vector.load %arg11[%c64, %c0_47] : memref<72x640xf32, #tpu.memory_space<vmem>>, vector<8x640xf32>
    tpu.vector_store %arg11[%c64, %c0_47], %111 {strides = array<i32>} : memref<72x640xf32, #tpu.memory_space<vmem>>, vector<8x640xf32>,
    %c0_48 = arith.constant 0 : index
    %c0_49 = arith.constant 0 : index
    %113 = vector.load %arg1[%c0_48, %c0_49] : memref<8x72xf32, #tpu.memory_space<vmem>>, vector<8x72xf32>
    %c0_50 = arith.constant 0 : index
    %c0_51 = arith.constant 0 : index
    %114 = vector.load %arg11[%c0_50, %c0_51] : memref<72x640xf32, #tpu.memory_space<vmem>>, vector<72x640xf32>
    %cst_52 = arith.constant dense<0.000000e+00> : vector<8x640xf32>
    %115 = tpu.matmul %113, %114, %cst_52 {dimension_numbers = #tpu.dot_dimension_numbers<[1], [0], [0], [1], [0, 0, 1, 1], [], []>} : vector<8x72xf32>, vector<72x640xf32>, vector<8x640xf32> -> vector<8x640xf32>
    %c0_53 = arith.constant 0 : index
    %c0_54 = arith.constant 0 : index
    %116 = vector.load %arg2[%c0_53, %c0_54] : memref<8x1xf32, #tpu.memory_space<vmem>>, vector<8x1xf32>
    %117 = vector.broadcast %116 : vector<8x1xf32> to vector<8x640xf32>
    %118 = arith.addf %115, %117 : vector<8x640xf32>
    %c0_55 = arith.constant 0 : index
    %c0_56 = arith.constant 0 : index
    %119 = vector.load %arg7[%c0_55, %c0_56] : memref<8x1xf32, #tpu.memory_space<vmem>>, vector<8x1xf32>
    %c0_57 = arith.constant 0 : index
    %c0_58 = arith.constant 0 : index
    %120 = vector.load %arg8[%c0_57, %c0_58] : memref<8x1xf32, #tpu.memory_space<vmem>>, vector<8x1xf32>
    %121 = vector.broadcast %35 : vector<1x640xf32> to vector<8x640xf32>
    %122 = arith.mulf %118, %121 : vector<8x640xf32>
    %cst_59 = arith.constant dense<0.000000e+00> : vector<8xf32>
    %123 = vector.multi_reduction <add>, %122, %cst_59 [1] : vector<8x640xf32> to vector<8xf32>
    %124 = vector.shape_cast %123 : vector<8xf32> to vector<8x1xf32>
    %cst_60 = arith.constant 0.001953125 : f32
    %125 = vector.broadcast %cst_60 : f32 to vector<8x1xf32>
    %126 = arith.mulf %124, %125 : vector<8x1xf32>
    %127 = vector.broadcast %126 : vector<8x1xf32> to vector<8x640xf32>
    %128 = arith.subf %118, %127 : vector<8x640xf32>
    %129 = vector.broadcast %35 : vector<1x640xf32> to vector<8x640xf32>
    %130 = arith.mulf %128, %129 : vector<8x640xf32>
    %131 = arith.mulf %130, %130 : vector<8x640xf32>
    %cst_61 = arith.constant dense<0.000000e+00> : vector<8xf32>
    %132 = vector.multi_reduction <add>, %131, %cst_61 [1] : vector<8x640xf32> to vector<8xf32>
    %133 = vector.shape_cast %132 : vector<8xf32> to vector<8x1xf32>
    %cst_62 = arith.constant 0.001953125 : f32
    %134 = vector.broadcast %cst_62 : f32 to vector<8x1xf32>
    %135 = arith.mulf %133, %134 : vector<8x1xf32>
    %cst_63 = arith.constant 9.99999974E-6 : f32
    %136 = vector.broadcast %cst_63 : f32 to vector<8x1xf32>
    %137 = arith.addf %135, %136 : vector<8x1xf32>
    %138 = math.rsqrt %137 : vector<8x1xf32>
    %139 = vector.broadcast %126 : vector<8x1xf32> to vector<8x640xf32>
    %140 = arith.subf %118, %139 : vector<8x640xf32>
    %141 = arith.mulf %138, %119 : vector<8x1xf32>
    %142 = vector.broadcast %141 : vector<8x1xf32> to vector<8x640xf32>
    %143 = arith.mulf %140, %142 : vector<8x640xf32>
    %144 = vector.broadcast %120 : vector<8x1xf32> to vector<8x640xf32>
    %145 = arith.addf %143, %144 : vector<8x640xf32>
    %cst_64 = arith.constant 0.000000e+00 : f32
    %146 = vector.broadcast %cst_64 : f32 to vector<8x640xf32>
    %147 = arith.maximumf %145, %146 : vector<8x640xf32>
    %148 = vector.broadcast %35 : vector<1x640xf32> to vector<8x640xf32>
    %149 = arith.mulf %147, %148 : vector<8x640xf32>
    %c0_65 = arith.constant 0 : index
    %c128_66 = arith.constant 128 : index
    %150 = vector.load %arg10[%c0_65, %c128_66] : memref<8x896xf32, #tpu.memory_space<vmem>>, vector<8x640xf32>
    tpu.vector_store %arg10[%c0_65, %c128_66], %149 {strides = array<i32>} : memref<8x896xf32, #tpu.memory_space<vmem>>, vector<8x640xf32>,
    %c0_67 = arith.constant 0 : index
    %c111_68 = arith.constant 111 : index
    %151 = vector.load %arg10[%c0_67, %c111_68] : memref<8x896xf32, #tpu.memory_space<vmem>>, vector<8x640xf32>
    %152 = vector.broadcast %39 : vector<1x640xf32> to vector<8x640xf32>
    %153 = arith.mulf %151, %152 : vector<8x640xf32>
    %c0_69 = arith.constant 0 : index
    %c0_70 = arith.constant 0 : index
    %154 = vector.load %arg11[%c0_69, %c0_70] : memref<72x640xf32, #tpu.memory_space<vmem>>, vector<8x640xf32>
    tpu.vector_store %arg11[%c0_69, %c0_70], %153 {strides = array<i32>} : memref<72x640xf32, #tpu.memory_space<vmem>>, vector<8x640xf32>,
    %c0_71 = arith.constant 0 : index
    %c112_72 = arith.constant 112 : index
    %155 = vector.load %arg10[%c0_71, %c112_72] : memref<8x896xf32, #tpu.memory_space<vmem>>, vector<8x640xf32>
    %c8_73 = arith.constant 8 : index
    %c0_74 = arith.constant 0 : index
    %156 = vector.load %arg11[%c8_73, %c0_74] : memref<72x640xf32, #tpu.memory_space<vmem>>, vector<8x640xf32>
    tpu.vector_store %arg11[%c8_73, %c0_74], %155 {strides = array<i32>} : memref<72x640xf32, #tpu.memory_space<vmem>>, vector<8x640xf32>,
    %c0_75 = arith.constant 0 : index
    %c113_76 = arith.constant 113 : index
    %157 = vector.load %arg10[%c0_75, %c113_76] : memref<8x896xf32, #tpu.memory_space<vmem>>, vector<8x640xf32>
    %158 = vector.broadcast %43 : vector<1x640xf32> to vector<8x640xf32>
    %159 = arith.mulf %157, %158 : vector<8x640xf32>
    %c16_77 = arith.constant 16 : index
    %c0_78 = arith.constant 0 : index
    %160 = vector.load %arg11[%c16_77, %c0_78] : memref<72x640xf32, #tpu.memory_space<vmem>>, vector<8x640xf32>
    tpu.vector_store %arg11[%c16_77, %c0_78], %159 {strides = array<i32>} : memref<72x640xf32, #tpu.memory_space<vmem>>, vector<8x640xf32>,
    %c0_79 = arith.constant 0 : index
    %c127_80 = arith.constant 127 : index
    %161 = vector.load %arg10[%c0_79, %c127_80] : memref<8x896xf32, #tpu.memory_space<vmem>>, vector<8x640xf32>
    %162 = vector.broadcast %39 : vector<1x640xf32> to vector<8x640xf32>
    %163 = arith.mulf %161, %162 : vector<8x640xf32>
    %c24_81 = arith.constant 24 : index
    %c0_82 = arith.constant 0 : index
    %164 = vector.load %arg11[%c24_81, %c0_82] : memref<72x640xf32, #tpu.memory_space<vmem>>, vector<8x640xf32>
    tpu.vector_store %arg11[%c24_81, %c0_82], %163 {strides = array<i32>} : memref<72x640xf32, #tpu.memory_space<vmem>>, vector<8x640xf32>,
    %c0_83 = arith.constant 0 : index
    %c128_84 = arith.constant 128 : index
    %165 = vector.load %arg10[%c0_83, %c128_84] : memref<8x896xf32, #tpu.memory_space<vmem>>, vector<8x640xf32>
    %c32_85 = arith.constant 32 : index
    %c0_86 = arith.constant 0 : index
    %166 = vector.load %arg11[%c32_85, %c0_86] : memref<72x640xf32, #tpu.memory_space<vmem>>, vector<8x640xf32>
    tpu.vector_store %arg11[%c32_85, %c0_86], %165 {strides = array<i32>} : memref<72x640xf32, #tpu.memory_space<vmem>>, vector<8x640xf32>,
    %c0_87 = arith.constant 0 : index
    %c129_88 = arith.constant 129 : index
    %167 = vector.load %arg10[%c0_87, %c129_88] : memref<8x896xf32, #tpu.memory_space<vmem>>, vector<8x640xf32>
    %168 = vector.broadcast %43 : vector<1x640xf32> to vector<8x640xf32>
    %169 = arith.mulf %167, %168 : vector<8x640xf32>
    %c40_89 = arith.constant 40 : index
    %c0_90 = arith.constant 0 : index
    %170 = vector.load %arg11[%c40_89, %c0_90] : memref<72x640xf32, #tpu.memory_space<vmem>>, vector<8x640xf32>
    tpu.vector_store %arg11[%c40_89, %c0_90], %169 {strides = array<i32>} : memref<72x640xf32, #tpu.memory_space<vmem>>, vector<8x640xf32>,
    %c0_91 = arith.constant 0 : index
    %c143_92 = arith.constant 143 : index
    %171 = vector.load %arg10[%c0_91, %c143_92] : memref<8x896xf32, #tpu.memory_space<vmem>>, vector<8x640xf32>
    %172 = vector.broadcast %39 : vector<1x640xf32> to vector<8x640xf32>
    %173 = arith.mulf %171, %172 : vector<8x640xf32>
    %c48_93 = arith.constant 48 : index
    %c0_94 = arith.constant 0 : index
    %174 = vector.load %arg11[%c48_93, %c0_94] : memref<72x640xf32, #tpu.memory_space<vmem>>, vector<8x640xf32>
    tpu.vector_store %arg11[%c48_93, %c0_94], %173 {strides = array<i32>} : memref<72x640xf32, #tpu.memory_space<vmem>>, vector<8x640xf32>,
    %c0_95 = arith.constant 0 : index
    %c144_96 = arith.constant 144 : index
    %175 = vector.load %arg10[%c0_95, %c144_96] : memref<8x896xf32, #tpu.memory_space<vmem>>, vector<8x640xf32>
    %c56_97 = arith.constant 56 : index
    %c0_98 = arith.constant 0 : index
    %176 = vector.load %arg11[%c56_97, %c0_98] : memref<72x640xf32, #tpu.memory_space<vmem>>, vector<8x640xf32>
    tpu.vector_store %arg11[%c56_97, %c0_98], %175 {strides = array<i32>} : memref<72x640xf32, #tpu.memory_space<vmem>>, vector<8x640xf32>,
    %c0_99 = arith.constant 0 : index
    %c145_100 = arith.constant 145 : index
    %177 = vector.load %arg10[%c0_99, %c145_100] : memref<8x896xf32, #tpu.memory_space<vmem>>, vector<8x640xf32>
    %178 = vector.broadcast %43 : vector<1x640xf32> to vector<8x640xf32>
    %179 = arith.mulf %177, %178 : vector<8x640xf32>
    %c64_101 = arith.constant 64 : index
    %c0_102 = arith.constant 0 : index
    %180 = vector.load %arg11[%c64_101, %c0_102] : memref<72x640xf32, #tpu.memory_space<vmem>>, vector<8x640xf32>
    tpu.vector_store %arg11[%c64_101, %c0_102], %179 {strides = array<i32>} : memref<72x640xf32, #tpu.memory_space<vmem>>, vector<8x640xf32>,
    %c0_103 = arith.constant 0 : index
    %c0_104 = arith.constant 0 : index
    %181 = vector.load %arg5[%c0_103, %c0_104] : memref<8x72xf32, #tpu.memory_space<vmem>>, vector<8x72xf32>
    %c0_105 = arith.constant 0 : index
    %c0_106 = arith.constant 0 : index
    %182 = vector.load %arg11[%c0_105, %c0_106] : memref<72x640xf32, #tpu.memory_space<vmem>>, vector<72x640xf32>
    %cst_107 = arith.constant dense<0.000000e+00> : vector<8x640xf32>
    %183 = tpu.matmul %181, %182, %cst_107 {dimension_numbers = #tpu.dot_dimension_numbers<[1], [0], [0], [1], [0, 0, 1, 1], [], []>} : vector<8x72xf32>, vector<72x640xf32>, vector<8x640xf32> -> vector<8x640xf32>
    %c0_108 = arith.constant 0 : index
    %c0_109 = arith.constant 0 : index
    %184 = vector.load %arg6[%c0_108, %c0_109] : memref<8x1xf32, #tpu.memory_space<vmem>>, vector<8x1xf32>
    %185 = vector.broadcast %184 : vector<8x1xf32> to vector<8x640xf32>
    %186 = arith.addf %183, %185 : vector<8x640xf32>
    %c0_110 = arith.constant 0 : index
    %c0_111 = arith.constant 0 : index
    %c0_112 = arith.constant 0 : index
    %187 = vector.load %arg0[%c0_110, %c0_111, %c0_112] : memref<2x4x256xf32, #tpu.memory_space<vmem>>, vector<1x4x256xf32>
    %188 = vector.shape_cast %187 : vector<1x4x256xf32> to vector<4x256xf32>
    %189 = vector.extract_strided_slice %186 {offsets = [0, 16], sizes = [4, 256], strides = [1, 1]} : vector<8x640xf32> to vector<4x256xf32>
    %190 = arith.addf %188, %189 : vector<4x256xf32>
    %c0_113 = arith.constant 0 : index
    %c0_114 = arith.constant 0 : index
    %c0_115 = arith.constant 0 : index
    %191 = vector.load %arg9[%c0_113, %c0_114, %c0_115] : memref<2x4x256xf32, #tpu.memory_space<vmem>>, vector<1x4x256xf32>
    %192 = vector.shape_cast %191 : vector<1x4x256xf32> to vector<4x256xf32>
    %193 = vector.shape_cast %190 : vector<4x256xf32> to vector<1x4x256xf32>
    tpu.vector_store %arg9[%c0_113, %c0_114, %c0_115], %193 {strides = array<i32>} : memref<2x4x256xf32, #tpu.memory_space<vmem>>, vector<1x4x256xf32>,
    %c1_116 = arith.constant 1 : index
    %c0_117 = arith.constant 0 : index
    %c0_118 = arith.constant 0 : index
    %194 = vector.load %arg0[%c1_116, %c0_117, %c0_118] : memref<2x4x256xf32, #tpu.memory_space<vmem>>, vector<1x4x256xf32>
    %195 = vector.shape_cast %194 : vector<1x4x256xf32> to vector<4x256xf32>
    %196 = vector.extract_strided_slice %186 {offsets = [0, 304], sizes = [4, 256], strides = [1, 1]} : vector<8x640xf32> to vector<4x256xf32>
    %197 = arith.addf %195, %196 : vector<4x256xf32>
    %c1_119 = arith.constant 1 : index
    %c0_120 = arith.constant 0 : index
    %c0_121 = arith.constant 0 : index
    %198 = vector.load %arg9[%c1_119, %c0_120, %c0_121] : memref<2x4x256xf32, #tpu.memory_space<vmem>>, vector<1x4x256xf32>
    %199 = vector.shape_cast %198 : vector<1x4x256xf32> to vector<4x256xf32>
    %200 = vector.shape_cast %197 : vector<4x256xf32> to vector<1x4x256xf32>
    tpu.vector_store %arg9[%c1_119, %c0_120, %c0_121], %200 {strides = array<i32>} : memref<2x4x256xf32, #tpu.memory_space<vmem>>, vector<1x4x256xf32>,
    return
  }
}

</mosaic_0001>

<llo_original>
// kernel: tpu_custom_call.1
$region0: #{tpu_custom_call.1}
  #allocation0 [shape = 'u32[]', space=smem, size = 0x4, offset = 0x4, fixed_abs, tag = 'smem constant byte address 0x4 - core index']
  #allocation1 [shape = 'u32[72,128]{1,0:T(1,128)}', space=vmem, size = 0x9000, scoped, tag = 'internal scratch']
  #allocation2 [shape = 'f32[8,896]{1,0:T(8,128)}', space=vmem, size = 0x7000, scoped, tag = 'scratch operand']
  #allocation3 [shape = 'f32[72,640]{1,0:T(8,128)}', space=vmem, size = 0x2d000, scoped, tag = 'scratch operand']
  %s0 = inlined_call_operand.vmem [shape: f32[2,4,256], index: 0, kind: input, shape index: {}]
  %s1 = inlined_call_operand.vmem [shape: f32[8,72], index: 1, kind: input, shape index: {}]
  %s2 = inlined_call_operand.vmem [shape: f32[8,1], index: 2, kind: input, shape index: {}]
  %s3 = inlined_call_operand.vmem [shape: f32[8,1], index: 3, kind: input, shape index: {}]
  %s4 = inlined_call_operand.vmem [shape: f32[8,1], index: 4, kind: input, shape index: {}]
  %s5 = inlined_call_operand.vmem [shape: f32[8,72], index: 5, kind: input, shape index: {}]
  %s6 = inlined_call_operand.vmem [shape: f32[8,1], index: 6, kind: input, shape index: {}]
  %s7 = inlined_call_operand.vmem [shape: f32[8,1], index: 7, kind: input, shape index: {}]
  %s8 = inlined_call_operand.vmem [shape: f32[8,1], index: 8, kind: input, shape index: {}]
  %s9 = inlined_call_operand.hbm [shape: f32[2,4,256], index: 9, kind: output, shape index: {}]
  %s10 = sld [smem:[#allocation0]]
  $region46: #{tpu_custom_call.1} parent=0
    _
  %s12 = ssub.s32 1, %s10
  %s13 = scalar_select 0, %s12, %s10
  $region1: #{tpu_custom_call.1} parent=0
    #allocation4 [shape = 'u8[8192]{0}', space=vmem, size = 0x2000, scoped, tag = 'output window, operand 0, single buffered']
    #allocation5 [shape = 's32[1]{0}', space=sflag, size = 0x4, scoped, tag = 'scoped memory for tpu_custom_call.1']
    %14 = vsyncpa [#allocation5], 0
    // Predicated region
    $region2: #{tpu_custom_call.1} parent=1 // pred_check
      _
    $region3: #{tpu_custom_call.1} parent=1 // pred_check_branch
      %16 = sbr.rel (0) target = $region5
    $region4: #{tpu_custom_call.1} parent=1 // pred_region
      _
    $region5: #{tpu_custom_call.1} parent=1 // pred_fallthru
      _
    // Predicated region
    $region6: #{tpu_custom_call.1} parent=1 // pred_check
      _
    $region7: #{tpu_custom_call.1} parent=1 // pred_check_branch
      %18 = sbr.rel (0) target = $region9
    $region8: #{tpu_custom_call.1} parent=1 // pred_region
      _
    $region9: #{tpu_custom_call.1} parent=1 // pred_fallthru
      _
    // Predicated region
    $region10: #{tpu_custom_call.1} parent=1 // pred_check
      _
    $region11: #{tpu_custom_call.1} parent=1 // pred_check_branch
      %20 = sbr.rel (0) target = $region13
    $region12: #{tpu_custom_call.1} parent=1 // pred_region
      _
    $region13: #{tpu_custom_call.1} parent=1 // pred_fallthru
      _
    // Predicated region
    $region14: #{tpu_custom_call.1} parent=1 // pred_check
      _
    $region15: #{tpu_custom_call.1} parent=1 // pred_check_branch
      %22 = sbr.rel (0) target = $region17
    $region16: #{tpu_custom_call.1} parent=1 // pred_region
      _
    $region17: #{tpu_custom_call.1} parent=1 // pred_fallthru
      _
    // Predicated region
    $region18: #{tpu_custom_call.1} parent=1 // pred_check
      _
    $region19: #{tpu_custom_call.1} parent=1 // pred_check_branch
      %24 = sbr.rel (0) target = $region21
    $region20: #{tpu_custom_call.1} parent=1 // pred_region
      _
    $region21: #{tpu_custom_call.1} parent=1 // pred_fallthru
      _
    // Predicated region
    $region22: #{tpu_custom_call.1} parent=1 // pred_check
      _
    $region23: #{tpu_custom_call.1} parent=1 // pred_check_branch
      %26 = sbr.rel (0) target = $region25
    $region24: #{tpu_custom_call.1} parent=1 // pred_region
      _
    $region25: #{tpu_custom_call.1} parent=1 // pred_fallthru
      _
    // Predicated region
    $region26: #{tpu_custom_call.1} parent=1 // pred_check
      _
    $region27: #{tpu_custom_call.1} parent=1 // pred_check_branch
      %28 = sbr.rel (0) target = $region29
    $region28: #{tpu_custom_call.1} parent=1 // pred_region
      _
    $region29: #{tpu_custom_call.1} parent=1 // pred_fallthru
      _
    // Predicated region
    $region30: #{tpu_custom_call.1} parent=1 // pred_check
      _
    $region31: #{tpu_custom_call.1} parent=1 // pred_check_branch
      %30 = sbr.rel (0) target = $region33
    $region32: #{tpu_custom_call.1} parent=1 // pred_region
      _
    $region33: #{tpu_custom_call.1} parent=1 // pred_fallthru
      _
    // Predicated region
    $region34: #{tpu_custom_call.1} parent=1 // pred_check
      _
    $region35: #{tpu_custom_call.1} parent=1 // pred_check_branch
      %32 = sbr.rel (0) target = $region37
    $region36: #{tpu_custom_call.1} parent=1 // pred_region
      _
    $region37: #{tpu_custom_call.1} parent=1 // pred_fallthru
      _
    %v33 = vlaneseq
    %v34 = vand.u32 %v33, 127
    %v35 = vadd.s32 %v34, 128
    %v36 = vadd.s32 %v34, 256
    %v37 = vadd.s32 %v34, 384
    %v38 = vadd.s32 %v34, 512
    %vm39 = vcmp.lt.s32.totalorder %v34, 0
    %v40 = vsub.s32 0, %v34
    %v41 = vsel %vm39, %v40, %v34
    %v42 = vshrl.u32 %v41, 4
    %v43 = vand.u32 %v41, 15
    %v44 = vsub.s32 0, %v43
    %v45 = vsel %vm39, %v44, %v43
    %vm46 = vcmp.lt.s32.totalorder %v35, 0
    %v47 = vsub.s32 0, %v35
    %v48 = vsel %vm46, %v47, %v35
    %v49 = vshrl.u32 %v48, 4
    %v50 = vand.u32 %v48, 15
    %v51 = vsub.s32 0, %v50
    %v52 = vsel %vm46, %v51, %v50
    %vm53 = vcmp.lt.s32.totalorder %v36, 0
    %v54 = vsub.s32 0, %v36
    %v55 = vsel %vm53, %v54, %v36
    %v56 = vshrl.u32 %v55, 4
    %v57 = vand.u32 %v55, 15
    %v58 = vsub.s32 0, %v57
    %v59 = vsel %vm53, %v58, %v57
    %vm60 = vcmp.lt.s32.totalorder %v37, 0
    %v61 = vsub.s32 0, %v37
    %v62 = vsel %vm60, %v61, %v37
    %v63 = vshrl.u32 %v62, 4
    %v64 = vand.u32 %v62, 15
    %v65 = vsub.s32 0, %v64
    %v66 = vsel %vm60, %v65, %v64
    %vm67 = vcmp.lt.s32.totalorder %v38, 0
    %v68 = vsub.s32 0, %v38
    %v69 = vsel %vm67, %v68, %v38
    %v70 = vshrl.u32 %v69, 4
    %v71 = vand.u32 %v69, 15
    %v72 = vsub.s32 0, %v71
    %v73 = vsel %vm67, %v72, %v71
    %vm74 = vcmp.ne.s32.totalorder %v45, 0
    %vm75 = vcmp.ne.s32.totalorder %v52, 0
    %vm76 = vcmp.ne.s32.totalorder %v59, 0
    %vm77 = vcmp.ne.s32.totalorder %v66, 0
    %vm78 = vcmp.ne.s32.totalorder %v73, 0
    %vm79 = vcmp.lt.s32.totalorder %v45, 0
    %vm80 = vcmp.lt.s32.totalorder %v52, 0
    %vm81 = vcmp.lt.s32.totalorder %v59, 0
    %vm82 = vcmp.lt.s32.totalorder %v66, 0
    %vm83 = vcmp.lt.s32.totalorder %v73, 0
    %vm84 = vmand %vm79, %vm74
    %vm85 = vmand %vm80, %vm75
    %vm86 = vmand %vm81, %vm76
    %vm87 = vmand %vm82, %vm77
    %vm88 = vmand %vm83, %vm78
    %v89 = vadd.s32 %v45, 16
    %v90 = vadd.s32 %v52, 16
    %v91 = vadd.s32 %v59, 16
    %v92 = vadd.s32 %v66, 16
    %v93 = vadd.s32 %v73, 16
    %v94 = vsel %vm84, %v89, %v45
    %v95 = vsel %vm85, %v90, %v52
    %v96 = vsel %vm86, %v91, %v59
    %v97 = vsel %vm87, %v92, %v66
    %v98 = vsel %vm88, %v93, %v73
    %vm99 = vcmp.lt.s32.totalorder %v34, 0
    %vm100 = vcmp.lt.s32.totalorder %v35, 0
    %vm101 = vcmp.lt.s32.totalorder %v36, 0
    %vm102 = vcmp.lt.s32.totalorder %v37, 0
    %vm103 = vcmp.lt.s32.totalorder %v38, 0
    %vm104 = vcmp.ge.s32.totalorder %v34, 16
    %vm105 = vcmp.ge.s32.totalorder %v35, 16
    %vm106 = vcmp.ge.s32.totalorder %v36, 16
    %vm107 = vcmp.ge.s32.totalorder %v37, 16
    %vm108 = vcmp.ge.s32.totalorder %v38, 16
    %vm109 = vcmp.lt.s32.totalorder %v34, 272
    %vm110 = vcmp.lt.s32.totalorder %v35, 272
    %vm111 = vcmp.lt.s32.totalorder %v36, 272
    %vm112 = vcmp.lt.s32.totalorder %v37, 272
    %vm113 = vcmp.lt.s32.totalorder %v38, 272
    %vm114 = vmand %vm104, %vm109
    %vm115 = vmand %vm105, %vm110
    %vm116 = vmand %vm106, %vm111
    %vm117 = vmand %vm107, %vm112
    %vm118 = vmand %vm108, %vm113
    %vm119 = vmor %vm99, %vm114
    %vm120 = vmor %vm100, %vm115
    %vm121 = vmor %vm101, %vm116
    %vm122 = vmor %vm102, %vm117
    %vm123 = vmor %vm103, %vm118
    %vm124 = vcmp.ge.s32.totalorder %v34, 304
    %vm125 = vcmp.ge.s32.totalorder %v35, 304
    %vm126 = vcmp.ge.s32.totalorder %v36, 304
    %vm127 = vcmp.ge.s32.totalorder %v37, 304
    %vm128 = vcmp.ge.s32.totalorder %v38, 304
    %vm129 = vcmp.lt.s32.totalorder %v34, 560
    %vm130 = vcmp.lt.s32.totalorder %v35, 560
    %vm131 = vcmp.lt.s32.totalorder %v36, 560
    %vm132 = vcmp.lt.s32.totalorder %v37, 560
    %vm133 = vcmp.lt.s32.totalorder %v38, 560
    %vm134 = vmand %vm124, %vm129
    %vm135 = vmand %vm125, %vm130
    %vm136 = vmand %vm126, %vm131
    %vm137 = vmand %vm127, %vm132
    %vm138 = vmand %vm128, %vm133
    %vm139 = vmor %vm119, %vm134
    %vm140 = vmor %vm120, %vm135
    %vm141 = vmor %vm121, %vm136
    %vm142 = vmor %vm122, %vm137
    %vm143 = vmor %vm123, %vm138
    %vm144 = vcmp.lt.s32.totalorder %v34, 576
    %vm145 = vcmp.lt.s32.totalorder %v35, 576
    %vm146 = vcmp.lt.s32.totalorder %v36, 576
    %vm147 = vcmp.lt.s32.totalorder %v37, 576
    %vm148 = vcmp.lt.s32.totalorder %v38, 576
    %vm149 = vmand %vm139, %vm144
    %vm150 = vmand %vm140, %vm145
    %vm151 = vmand %vm141, %vm146
    %vm152 = vmand %vm142, %vm147
    %vm153 = vmand %vm143, %vm148
    %v154 = vsel %vm149, 1, 0
    %v155 = vsel %vm150, 1, 0
    %v156 = vsel %vm151, 1, 0
    %v157 = vsel %vm152, 1, 0
    %v158 = vsel %vm153, 1, 0
    %v159 = vcvt.s32.f32 %v154
    %v160 = vcvt.s32.f32 %v155
    %v161 = vcvt.s32.f32 %v156
    %v162 = vcvt.s32.f32 %v157
    %v163 = vcvt.s32.f32 %v158
    %vm164 = vcmp.gt.s32.totalorder %v94, 0
    %vm165 = vcmp.gt.s32.totalorder %v95, 0
    %vm166 = vcmp.gt.s32.totalorder %v96, 0
    %vm167 = vcmp.gt.s32.totalorder %v97, 0
    %vm168 = vcmp.gt.s32.totalorder %v98, 0
    %v169 = vsel %vm164, 1, 0
    %v170 = vsel %vm165, 1, 0
    %v171 = vsel %vm166, 1, 0
    %v172 = vsel %vm167, 1, 0
    %v173 = vsel %vm168, 1, 0
    %v174 = vcvt.s32.f32 %v169
    %v175 = vcvt.s32.f32 %v170
    %v176 = vcvt.s32.f32 %v171
    %v177 = vcvt.s32.f32 %v172
    %v178 = vcvt.s32.f32 %v173
    %vm179 = vcmp.lt.s32.totalorder %v94, 15
    %vm180 = vcmp.lt.s32.totalorder %v95, 15
    %vm181 = vcmp.lt.s32.totalorder %v96, 15
    %vm182 = vcmp.lt.s32.totalorder %v97, 15
    %vm183 = vcmp.lt.s32.totalorder %v98, 15
    %v184 = vsel %vm179, 1, 0
    %v185 = vsel %vm180, 1, 0
    %v186 = vsel %vm181, 1, 0
    %v187 = vsel %vm182, 1, 0
    %v188 = vsel %vm183, 1, 0
    %v189 = vcvt.s32.f32 %v184
    %v190 = vcvt.s32.f32 %v185
    %v191 = vcvt.s32.f32 %v186
    %v192 = vcvt.s32.f32 %v187
    %v193 = vcvt.s32.f32 %v188
    %194 = vst [vmem:[#allocation2] sm:$0xff] 0.0
    %195 = vst [vmem:[#allocation2 + $0x8] sm:$0xff] 0.0
    %196 = vst [vmem:[#allocation2 + $0x10] sm:$0xff] 0.0
    %197 = vst [vmem:[#allocation2 + $0x18] sm:$0xff] 0.0
    %198 = vst [vmem:[#allocation2 + $0x20] sm:$0xff] 0.0
    %199 = vst [vmem:[#allocation2 + $0x28] sm:$0xff] 0.0
    %200 = vst [vmem:[#allocation2 + $0x30] sm:$0xff] 0.0
    %v201 = vld [vmem:[%s0] sm:$0xff]
    %203 = vst [vmem:[#allocation1] ss:$2 sm:$0xff] %v201
    %v204 = vld.sshfl [vmem:[#allocation1] sm:$0xff pattern:$0x75316420]
    %v205 = vld.sshfl [vmem:[#allocation1 + $0x8] sm:$0xff pattern:$0x75316420]
    %206 = vrot.lane.b32.xlu0 %v204, 16
    %v207 = vpop.permute.xlu0 %206
    %208 = vrot.lane.b32.xlu0 %v205, 16
    %v209 = vpop.permute.xlu0 %208
    %vm210 = vcmask 130048
    %v211 = vsel %vm210, %v207, %v209
    %vm215 = vcmask 1043584
    %216 = vst.msk [vmem:[#allocation2 + $0x8] sm:$0xf] %vm215, %v207
    %217 = vst [vmem:[#allocation2 + $0x10] sm:$0xf] %v211
    %vm218 = vcmask 125952
    %219 = vst.msk [vmem:[#allocation2 + $0x18] sm:$0xf] %vm218, %v209
    %s220 = scalar_lea.vmem %s0, 8
    %v221 = vld [vmem:[%s220] sm:$0xff]
    %223 = vst [vmem:[#allocation1] ss:$2 sm:$0xff] %v221
    %v224 = vld.sshfl [vmem:[#allocation1] sm:$0xff pattern:$0x75316420]
    %v225 = vld.sshfl [vmem:[#allocation1 + $0x8] sm:$0xff pattern:$0x75316420]
    %226 = vrot.lane.b32.xlu0 %v224, 48
    %v227 = vpop.permute.xlu0 %226
    %228 = vrot.lane.b32.xlu0 %v225, 48
    %v229 = vpop.permute.xlu0 %228
    %vm230 = vcmask 392192
    %v231 = vsel %vm230, %v227, %v229
    %vm235 = vcmask 1043840
    %236 = vst.msk [vmem:[#allocation2 + $0x18] sm:$0xf] %vm235, %v227
    %237 = vst [vmem:[#allocation2 + $0x20] sm:$0xf] %v231
    %vm238 = vcmask 388096
    %239 = vst.msk [vmem:[#allocation2 + $0x28] sm:$0xf] %vm238, %v229
    %v240 = vld [vmem:[#allocation2 + $0x8] sm:$0xff]
    %v241 = vld [vmem:[#allocation2 + $0x10] sm:$0xff]
    %v242 = vld [vmem:[#allocation2 + $0x18] sm:$0xff]
    %v243 = vld [vmem:[#allocation2 + $0x20] sm:$0xff]
    %v244 = vld [vmem:[#allocation2 + $0x28] sm:$0xff]
    %v245 = vld [vmem:[%s3] sm:$0xff]
    %v246 = vld [vmem:[%s4] sm:$0xff]
    %v247 = vadd.f32 %v240, %v241
    %v248 = vadd.f32 %v247, %v242
    %v249 = vadd.f32 %v248, %v243
    %v250 = vadd.f32 %v249, %v244
    %251 = vadd.xlane.f32.xlu0 %v250
    %v252 = vpop.xlane.xlu0 %251
    %v253 = vmul.f32 %v252, 0.001953125
    %v254 = vsub.f32 %v240, %v253
    %v255 = vsub.f32 %v241, %v253
    %v256 = vsub.f32 %v242, %v253
    %v257 = vsub.f32 %v243, %v253
    %v258 = vsub.f32 %v244, %v253
    %v259 = vmul.f32 %v254, %v159
    %v260 = vmul.f32 %v255, %v160
    %v261 = vmul.f32 %v256, %v161
    %v262 = vmul.f32 %v257, %v162
    %v263 = vmul.f32 %v258, %v163
    %v264 = vmul.f32 %v259, %v259
    %v265 = vmul.f32 %v260, %v260
    %v266 = vmul.f32 %v261, %v261
    %v267 = vmul.f32 %v262, %v262
    %v268 = vmul.f32 %v263, %v263
    %v269 = vadd.f32 %v264, %v265
    %v270 = vadd.f32 %v269, %v266
    %v271 = vadd.f32 %v270, %v267
    %v272 = vadd.f32 %v271, %v268
    %273 = vadd.xlane.f32.xlu0 %v272
    %v274 = vpop.xlane.xlu0 %273
    %v275 = vmul.f32 %v274, 0.001953125
    %v276 = vadd.f32 %v275, 1e-05
    %v277 = vrsqrt.pop %v276
    %v278 = vmul.f32 %v277, %v276
    %v279 = vmul.f32 %v278, %v277
    %v280 = vmul.f32 0.5, %v279
    %v281 = vsub.f32 1.5, %v280
    %v282 = vmul.f32 %v277, %v281
    %vm283 = vweird.f32 %v276
    %vm284 = vweird.f32 %v277
    %vm285 = vmor %vm283, %vm284
    %v286 = vsel %vm285, %v277, %v282
    %v287 = vmul.f32 %v286, %v245
    %289 = vset.pattern.permute.xlu0 0
    %290 = vperm.xlu0 %289, %v287
    %v291 = vpop.permute.xlu0 %290
    %v293 = vmul.f32 %v254, %v291
    %v294 = vmul.f32 %v255, %v291
    %v295 = vmul.f32 %v256, %v291
    %v296 = vmul.f32 %v257, %v291
    %v297 = vmul.f32 %v258, %v291
    %299 = vset.pattern.permute.xlu0 0
    %300 = vperm.xlu0 %299, %v246
    %v301 = vpop.permute.xlu0 %300
    %v303 = vadd.f32 %v293, %v301
    %v304 = vadd.f32 %v294, %v301
    %v305 = vadd.f32 %v295, %v301
    %v306 = vadd.f32 %v296, %v301
    %v307 = vadd.f32 %v297, %v301
    %v308 = vmax.f32 %v303, 0.0
    %v309 = vmax.f32 %v304, 0.0
    %v310 = vmax.f32 %v305, 0.0
    %v311 = vmax.f32 %v306, 0.0
    %v312 = vmax.f32 %v307, 0.0
    %v313 = vmul.f32 %v308, %v159
    %v314 = vmul.f32 %v309, %v160
    %v315 = vmul.f32 %v310, %v161
    %v316 = vmul.f32 %v311, %v162
    %v317 = vmul.f32 %v312, %v163
    %318 = vst [vmem:[#allocation2 + $0x8] sm:$0xff] %v313
    %319 = vst [vmem:[#allocation2 + $0x10] sm:$0xff] %v314
    %320 = vst [vmem:[#allocation2 + $0x18] sm:$0xff] %v315
    %321 = vst [vmem:[#allocation2 + $0x20] sm:$0xff] %v316
    %322 = vst [vmem:[#allocation2 + $0x28] sm:$0xff] %v317
    %v323 = vld [vmem:[#allocation2] sm:$0xff]
    %v324 = vld [vmem:[#allocation2 + $0x8] sm:$0xff]
    %v325 = vld [vmem:[#allocation2 + $0x10] sm:$0xff]
    %v326 = vld [vmem:[#allocation2 + $0x18] sm:$0xff]
    %v327 = vld [vmem:[#allocation2 + $0x20] sm:$0xff]
    %v328 = vld [vmem:[#allocation2 + $0x28] sm:$0xff]
    %334 = vrot.lane.b32.xlu0 %v174, 111
    %v335 = vpop.permute.xlu0 %334
    %336 = vrot.lane.b32.xlu0 %v175, 111
    %v337 = vpop.permute.xlu0 %336
    %338 = vrot.lane.b32.xlu0 %v176, 111
    %v339 = vpop.permute.xlu0 %338
    %340 = vrot.lane.b32.xlu0 %v177, 111
    %v341 = vpop.permute.xlu0 %340
    %342 = vrot.lane.b32.xlu0 %v178, 111
    %v343 = vpop.permute.xlu0 %342
    %vm344 = vcmask 908288
    %v345 = vsel %vm344, %v335, %v337
    %v346 = vsel %vm344, %v337, %v339
    %v347 = vsel %vm344, %v339, %v341
    %v348 = vsel %vm344, %v341, %v343
    %v355 = vmul.f32 %v323, %v335
    %v356 = vmul.f32 %v324, %v345
    %v357 = vmul.f32 %v325, %v346
    %v358 = vmul.f32 %v326, %v347
    %v359 = vmul.f32 %v327, %v348
    %v360 = vmul.f32 %v328, %v343
    %367 = vrot.lane.b32.xlu0 %v355, 17
    %v368 = vpop.permute.xlu0 %367
    %369 = vrot.lane.b32.xlu0 %v356, 17
    %v370 = vpop.permute.xlu0 %369
    %371 = vrot.lane.b32.xlu0 %v357, 17
    %v372 = vpop.permute.xlu0 %371
    %373 = vrot.lane.b32.xlu0 %v358, 17
    %v374 = vpop.permute.xlu0 %373
    %375 = vrot.lane.b32.xlu0 %v359, 17
    %v376 = vpop.permute.xlu0 %375
    %377 = vrot.lane.b32.xlu0 %v360, 17
    %v378 = vpop.permute.xlu0 %377
    %vm379 = vcmask 138240
    %v380 = vsel %vm379, %v368, %v370
    %v381 = vsel %vm379, %v370, %v372
    %v382 = vsel %vm379, %v372, %v374
    %v383 = vsel %vm379, %v374, %v376
    %v384 = vsel %vm379, %v376, %v378
    %390 = vst [vmem:[#allocation3] sm:$0xff] %v380
    %391 = vst [vmem:[#allocation3 + $0x8] sm:$0xff] %v381
    %392 = vst [vmem:[#allocation3 + $0x10] sm:$0xff] %v382
    %393 = vst [vmem:[#allocation3 + $0x18] sm:$0xff] %v383
    %394 = vst [vmem:[#allocation3 + $0x20] sm:$0xff] %v384
    %v395 = vld [vmem:[#allocation2] sm:$0xff]
    %v396 = vld [vmem:[#allocation2 + $0x8] sm:$0xff]
    %v397 = vld [vmem:[#allocation2 + $0x10] sm:$0xff]
    %v398 = vld [vmem:[#allocation2 + $0x18] sm:$0xff]
    %v399 = vld [vmem:[#allocation2 + $0x20] sm:$0xff]
    %v400 = vld [vmem:[#allocation2 + $0x28] sm:$0xff]
    %407 = vrot.lane.b32.xlu0 %v395, 16
    %v408 = vpop.permute.xlu0 %407
    %409 = vrot.lane.b32.xlu0 %v396, 16
    %v410 = vpop.permute.xlu0 %409
    %411 = vrot.lane.b32.xlu0 %v397, 16
    %v412 = vpop.permute.xlu0 %411
    %413 = vrot.lane.b32.xlu0 %v398, 16
    %v414 = vpop.permute.xlu0 %413
    %415 = vrot.lane.b32.xlu0 %v399, 16
    %v416 = vpop.permute.xlu0 %415
    %417 = vrot.lane.b32.xlu0 %v400, 16
    %v418 = vpop.permute.xlu0 %417
    %v419 = vsel %vm210, %v408, %v410
    %v420 = vsel %vm210, %v410, %v412
    %v421 = vsel %vm210, %v412, %v414
    %v422 = vsel %vm210, %v414, %v416
    %v423 = vsel %vm210, %v416, %v418
    %429 = vst [vmem:[#allocation3 + $0x28] sm:$0xff] %v419
    %430 = vst [vmem:[#allocation3 + $0x30] sm:$0xff] %v420
    %431 = vst [vmem:[#allocation3 + $0x38] sm:$0xff] %v421
    %432 = vst [vmem:[#allocation3 + $0x40] sm:$0xff] %v422
    %433 = vst [vmem:[#allocation3 + $0x48] sm:$0xff] %v423
    %v434 = vld [vmem:[#allocation2] sm:$0xff]
    %v435 = vld [vmem:[#allocation2 + $0x8] sm:$0xff]
    %v436 = vld [vmem:[#allocation2 + $0x10] sm:$0xff]
    %v437 = vld [vmem:[#allocation2 + $0x18] sm:$0xff]
    %v438 = vld [vmem:[#allocation2 + $0x20] sm:$0xff]
    %v439 = vld [vmem:[#allocation2 + $0x28] sm:$0xff]
    %445 = vrot.lane.b32.xlu0 %v189, 113
    %v446 = vpop.permute.xlu0 %445
    %447 = vrot.lane.b32.xlu0 %v190, 113
    %v448 = vpop.permute.xlu0 %447
    %449 = vrot.lane.b32.xlu0 %v191, 113
    %v450 = vpop.permute.xlu0 %449
    %451 = vrot.lane.b32.xlu0 %v192, 113
    %v452 = vpop.permute.xlu0 %451
    %453 = vrot.lane.b32.xlu0 %v193, 113
    %v454 = vpop.permute.xlu0 %453
    %vm455 = vcmask 924672
    %v456 = vsel %vm455, %v446, %v448
    %v457 = vsel %vm455, %v448, %v450
    %v458 = vsel %vm455, %v450, %v452
    %v459 = vsel %vm455, %v452, %v454
    %v466 = vmul.f32 %v434, %v446
    %v467 = vmul.f32 %v435, %v456
    %v468 = vmul.f32 %v436, %v457
    %v469 = vmul.f32 %v437, %v458
    %v470 = vmul.f32 %v438, %v459
    %v471 = vmul.f32 %v439, %v454
    %478 = vrot.lane.b32.xlu0 %v466, 15
    %v479 = vpop.permute.xlu0 %478
    %480 = vrot.lane.b32.xlu0 %v467, 15
    %v481 = vpop.permute.xlu0 %480
    %482 = vrot.lane.b32.xlu0 %v468, 15
    %v483 = vpop.permute.xlu0 %482
    %484 = vrot.lane.b32.xlu0 %v469, 15
    %v485 = vpop.permute.xlu0 %484
    %486 = vrot.lane.b32.xlu0 %v470, 15
    %v487 = vpop.permute.xlu0 %486
    %488 = vrot.lane.b32.xlu0 %v471, 15
    %v489 = vpop.permute.xlu0 %488
    %vm490 = vcmask 121856
    %v491 = vsel %vm490, %v479, %v481
    %v492 = vsel %vm490, %v481, %v483
    %v493 = vsel %vm490, %v483, %v485
    %v494 = vsel %vm490, %v485, %v487
    %v495 = vsel %vm490, %v487, %v489
    %501 = vst [vmem:[#allocation3 + $0x50] sm:$0xff] %v491
    %502 = vst [vmem:[#allocation3 + $0x58] sm:$0xff] %v492
    %503 = vst [vmem:[#allocation3 + $0x60] sm:$0xff] %v493
    %504 = vst [vmem:[#allocation3 + $0x68] sm:$0xff] %v494
    %505 = vst [vmem:[#allocation3 + $0x70] sm:$0xff] %v495
    %v506 = vld [vmem:[#allocation2] sm:$0xff]
    %v507 = vld [vmem:[#allocation2 + $0x8] sm:$0xff]
    %v508 = vld [vmem:[#allocation2 + $0x10] sm:$0xff]
    %v509 = vld [vmem:[#allocation2 + $0x18] sm:$0xff]
    %v510 = vld [vmem:[#allocation2 + $0x20] sm:$0xff]
    %v511 = vld [vmem:[#allocation2 + $0x28] sm:$0xff]
    %512 = vrot.lane.b32.xlu0 %v174, 127
    %v513 = vpop.permute.xlu0 %512
    %514 = vrot.lane.b32.xlu0 %v175, 127
    %v515 = vpop.permute.xlu0 %514
    %516 = vrot.lane.b32.xlu0 %v176, 127
    %v517 = vpop.permute.xlu0 %516
    %518 = vrot.lane.b32.xlu0 %v177, 127
    %v519 = vpop.permute.xlu0 %518
    %520 = vrot.lane.b32.xlu0 %v178, 127
    %v521 = vpop.permute.xlu0 %520
    %vm522 = vcmask 1039360
    %v523 = vsel %vm522, %v513, %v515
    %v524 = vsel %vm522, %v515, %v517
    %v525 = vsel %vm522, %v517, %v519
    %v526 = vsel %vm522, %v519, %v521
    %v533 = vmul.f32 %v506, %v513
    %v534 = vmul.f32 %v507, %v523
    %v535 = vmul.f32 %v508, %v524
    %v536 = vmul.f32 %v509, %v525
    %v537 = vmul.f32 %v510, %v526
    %v538 = vmul.f32 %v511, %v521
    %545 = vrot.lane.b32.xlu0 %v533, 1
    %v546 = vpop.permute.xlu0 %545
    %547 = vrot.lane.b32.xlu0 %v534, 1
    %v548 = vpop.permute.xlu0 %547
    %549 = vrot.lane.b32.xlu0 %v535, 1
    %v550 = vpop.permute.xlu0 %549
    %551 = vrot.lane.b32.xlu0 %v536, 1
    %v552 = vpop.permute.xlu0 %551
    %553 = vrot.lane.b32.xlu0 %v537, 1
    %v554 = vpop.permute.xlu0 %553
    %555 = vrot.lane.b32.xlu0 %v538, 1
    %v556 = vpop.permute.xlu0 %555
    %vm557 = vcmask 7168
    %v558 = vsel %vm557, %v546, %v548
    %v559 = vsel %vm557, %v548, %v550
    %v560 = vsel %vm557, %v550, %v552
    %v561 = vsel %vm557, %v552, %v554
    %v562 = vsel %vm557, %v554, %v556
    %568 = vst [vmem:[#allocation3 + $0x78] sm:$0xff] %v558
    %569 = vst [vmem:[#allocation3 + $0x80] sm:$0xff] %v559
    %570 = vst [vmem:[#allocation3 + $0x88] sm:$0xff] %v560
    %571 = vst [vmem:[#allocation3 + $0x90] sm:$0xff] %v561
    %572 = vst [vmem:[#allocation3 + $0x98] sm:$0xff] %v562
    %v573 = vld [vmem:[#allocation2 + $0x8] sm:$0xff]
    %v574 = vld [vmem:[#allocation2 + $0x10] sm:$0xff]
    %v575 = vld [vmem:[#allocation2 + $0x18] sm:$0xff]
    %v576 = vld [vmem:[#allocation2 + $0x20] sm:$0xff]
    %v577 = vld [vmem:[#allocation2 + $0x28] sm:$0xff]
    %578 = vst [vmem:[#allocation3 + $0xa0] sm:$0xff] %v573
    %579 = vst [vmem:[#allocation3 + $0xa8] sm:$0xff] %v574
    %580 = vst [vmem:[#allocation3 + $0xb0] sm:$0xff] %v575
    %581 = vst [vmem:[#allocation3 + $0xb8] sm:$0xff] %v576
    %582 = vst [vmem:[#allocation3 + $0xc0] sm:$0xff] %v577
    %v583 = vld [vmem:[#allocation2 + $0x8] sm:$0xff]
    %v584 = vld [vmem:[#allocation2 + $0x10] sm:$0xff]
    %v585 = vld [vmem:[#allocation2 + $0x18] sm:$0xff]
    %v586 = vld [vmem:[#allocation2 + $0x20] sm:$0xff]
    %v587 = vld [vmem:[#allocation2 + $0x28] sm:$0xff]
    %v588 = vld [vmem:[#allocation2 + $0x30] sm:$0xff]
    %589 = vrot.lane.b32.xlu0 %v189, 1
    %v590 = vpop.permute.xlu0 %589
    %591 = vrot.lane.b32.xlu0 %v190, 1
    %v592 = vpop.permute.xlu0 %591
    %593 = vrot.lane.b32.xlu0 %v191, 1
    %v594 = vpop.permute.xlu0 %593
    %595 = vrot.lane.b32.xlu0 %v192, 1
    %v596 = vpop.permute.xlu0 %595
    %597 = vrot.lane.b32.xlu0 %v193, 1
    %v598 = vpop.permute.xlu0 %597
    %v599 = vsel %vm557, %v590, %v592
    %v600 = vsel %vm557, %v592, %v594
    %v601 = vsel %vm557, %v594, %v596
    %v602 = vsel %vm557, %v596, %v598
    %v609 = vmul.f32 %v583, %v590
    %v610 = vmul.f32 %v584, %v599
    %v611 = vmul.f32 %v585, %v600
    %v612 = vmul.f32 %v586, %v601
    %v613 = vmul.f32 %v587, %v602
    %v614 = vmul.f32 %v588, %v598
    %621 = vrot.lane.b32.xlu0 %v609, 127
    %v622 = vpop.permute.xlu0 %621
    %623 = vrot.lane.b32.xlu0 %v610, 127
    %v624 = vpop.permute.xlu0 %623
    %625 = vrot.lane.b32.xlu0 %v611, 127
    %v626 = vpop.permute.xlu0 %625
    %627 = vrot.lane.b32.xlu0 %v612, 127
    %v628 = vpop.permute.xlu0 %627
    %629 = vrot.lane.b32.xlu0 %v613, 127
    %v630 = vpop.permute.xlu0 %629
    %631 = vrot.lane.b32.xlu0 %v614, 127
    %v632 = vpop.permute.xlu0 %631
    %v633 = vsel %vm522, %v622, %v624
    %v634 = vsel %vm522, %v624, %v626
    %v635 = vsel %vm522, %v626, %v628
    %v636 = vsel %vm522, %v628, %v630
    %v637 = vsel %vm522, %v630, %v632
    %643 = vst [vmem:[#allocation3 + $0xc8] sm:$0xff] %v633
    %644 = vst [vmem:[#allocation3 + $0xd0] sm:$0xff] %v634
    %645 = vst [vmem:[#allocation3 + $0xd8] sm:$0xff] %v635
    %646 = vst [vmem:[#allocation3 + $0xe0] sm:$0xff] %v636
    %647 = vst [vmem:[#allocation3 + $0xe8] sm:$0xff] %v637
    %v648 = vld [vmem:[#allocation2 + $0x8] sm:$0xff]
    %v649 = vld [vmem:[#allocation2 + $0x10] sm:$0xff]
    %v650 = vld [vmem:[#allocation2 + $0x18] sm:$0xff]
    %v651 = vld [vmem:[#allocation2 + $0x20] sm:$0xff]
    %v652 = vld [vmem:[#allocation2 + $0x28] sm:$0xff]
    %v653 = vld [vmem:[#allocation2 + $0x30] sm:$0xff]
    %654 = vrot.lane.b32.xlu0 %v174, 15
    %v655 = vpop.permute.xlu0 %654
    %656 = vrot.lane.b32.xlu0 %v175, 15
    %v657 = vpop.permute.xlu0 %656
    %658 = vrot.lane.b32.xlu0 %v176, 15
    %v659 = vpop.permute.xlu0 %658
    %660 = vrot.lane.b32.xlu0 %v177, 15
    %v661 = vpop.permute.xlu0 %660
    %662 = vrot.lane.b32.xlu0 %v178, 15
    %v663 = vpop.permute.xlu0 %662
    %v664 = vsel %vm490, %v655, %v657
    %v665 = vsel %vm490, %v657, %v659
    %v666 = vsel %vm490, %v659, %v661
    %v667 = vsel %vm490, %v661, %v663
    %v674 = vmul.f32 %v648, %v655
    %v675 = vmul.f32 %v649, %v664
    %v676 = vmul.f32 %v650, %v665
    %v677 = vmul.f32 %v651, %v666
    %v678 = vmul.f32 %v652, %v667
    %v679 = vmul.f32 %v653, %v663
    %686 = vrot.lane.b32.xlu0 %v674, 113
    %v687 = vpop.permute.xlu0 %686
    %688 = vrot.lane.b32.xlu0 %v675, 113
    %v689 = vpop.permute.xlu0 %688
    %690 = vrot.lane.b32.xlu0 %v676, 113
    %v691 = vpop.permute.xlu0 %690
    %692 = vrot.lane.b32.xlu0 %v677, 113
    %v693 = vpop.permute.xlu0 %692
    %694 = vrot.lane.b32.xlu0 %v678, 113
    %v695 = vpop.permute.xlu0 %694
    %696 = vrot.lane.b32.xlu0 %v679, 113
    %v697 = vpop.permute.xlu0 %696
    %v698 = vsel %vm455, %v687, %v689
    %v699 = vsel %vm455, %v689, %v691
    %v700 = vsel %vm455, %v691, %v693
    %v701 = vsel %vm455, %v693, %v695
    %v702 = vsel %vm455, %v695, %v697
    %708 = vst [vmem:[#allocation3 + $0xf0] sm:$0xff] %v698
    %709 = vst [vmem:[#allocation3 + $0xf8] sm:$0xff] %v699
    %710 = vst [vmem:[#allocation3 + $0x100] sm:$0xff] %v700
    %711 = vst [vmem:[#allocation3 + $0x108] sm:$0xff] %v701
    %712 = vst [vmem:[#allocation3 + $0x110] sm:$0xff] %v702
    %v713 = vld [vmem:[#allocation2 + $0x8] sm:$0xff]
    %v714 = vld [vmem:[#allocation2 + $0x10] sm:$0xff]
    %v715 = vld [vmem:[#allocation2 + $0x18] sm:$0xff]
    %v716 = vld [vmem:[#allocation2 + $0x20] sm:$0xff]
    %v717 = vld [vmem:[#allocation2 + $0x28] sm:$0xff]
    %v718 = vld [vmem:[#allocation2 + $0x30] sm:$0xff]
    %725 = vrot.lane.b32.xlu0 %v713, 112
    %v726 = vpop.permute.xlu0 %725
    %727 = vrot.lane.b32.xlu0 %v714, 112
    %v728 = vpop.permute.xlu0 %727
    %729 = vrot.lane.b32.xlu0 %v715, 112
    %v730 = vpop.permute.xlu0 %729
    %731 = vrot.lane.b32.xlu0 %v716, 112
    %v732 = vpop.permute.xlu0 %731
    %733 = vrot.lane.b32.xlu0 %v717, 112
    %v734 = vpop.permute.xlu0 %733
    %735 = vrot.lane.b32.xlu0 %v718, 112
    %v736 = vpop.permute.xlu0 %735
    %vm737 = vcmask 916480
    %v738 = vsel %vm737, %v726, %v728
    %v739 = vsel %vm737, %v728, %v730
    %v740 = vsel %vm737, %v730, %v732
    %v741 = vsel %vm737, %v732, %v734
    %v742 = vsel %vm737, %v734, %v736
    %748 = vst [vmem:[#allocation3 + $0x118] sm:$0xff] %v738
    %749 = vst [vmem:[#allocation3 + $0x120] sm:$0xff] %v739
    %750 = vst [vmem:[#allocation3 + $0x128] sm:$0xff] %v740
    %751 = vst [vmem:[#allocation3 + $0x130] sm:$0xff] %v741
    %752 = vst [vmem:[#allocation3 + $0x138] sm:$0xff] %v742
    %v753 = vld [vmem:[#allocation2 + $0x8] sm:$0xff]
    %v754 = vld [vmem:[#allocation2 + $0x10] sm:$0xff]
    %v755 = vld [vmem:[#allocation2 + $0x18] sm:$0xff]
    %v756 = vld [vmem:[#allocation2 + $0x20] sm:$0xff]
    %v757 = vld [vmem:[#allocation2 + $0x28] sm:$0xff]
    %v758 = vld [vmem:[#allocation2 + $0x30] sm:$0xff]
    %759 = vrot.lane.b32.xlu0 %v189, 17
    %v760 = vpop.permute.xlu0 %759
    %761 = vrot.lane.b32.xlu0 %v190, 17
    %v762 = vpop.permute.xlu0 %761
    %763 = vrot.lane.b32.xlu0 %v191, 17
    %v764 = vpop.permute.xlu0 %763
    %765 = vrot.lane.b32.xlu0 %v192, 17
    %v766 = vpop.permute.xlu0 %765
    %767 = vrot.lane.b32.xlu0 %v193, 17
    %v768 = vpop.permute.xlu0 %767
    %v769 = vsel %vm379, %v760, %v762
    %v770 = vsel %vm379, %v762, %v764
    %v771 = vsel %vm379, %v764, %v766
    %v772 = vsel %vm379, %v766, %v768
    %v779 = vmul.f32 %v753, %v760
    %v780 = vmul.f32 %v754, %v769
    %v781 = vmul.f32 %v755, %v770
    %v782 = vmul.f32 %v756, %v771
    %v783 = vmul.f32 %v757, %v772
    %v784 = vmul.f32 %v758, %v768
    %791 = vrot.lane.b32.xlu0 %v779, 111
    %v792 = vpop.permute.xlu0 %791
    %793 = vrot.lane.b32.xlu0 %v780, 111
    %v794 = vpop.permute.xlu0 %793
    %795 = vrot.lane.b32.xlu0 %v781, 111
    %v796 = vpop.permute.xlu0 %795
    %797 = vrot.lane.b32.xlu0 %v782, 111
    %v798 = vpop.permute.xlu0 %797
    %799 = vrot.lane.b32.xlu0 %v783, 111
    %v800 = vpop.permute.xlu0 %799
    %801 = vrot.lane.b32.xlu0 %v784, 111
    %v802 = vpop.permute.xlu0 %801
    %v803 = vsel %vm344, %v792, %v794
    %v804 = vsel %vm344, %v794, %v796
    %v805 = vsel %vm344, %v796, %v798
    %v806 = vsel %vm344, %v798, %v800
    %v807 = vsel %vm344, %v800, %v802
    %813 = vst [vmem:[#allocation3 + $0x140] sm:$0xff] %v803
    %814 = vst [vmem:[#allocation3 + $0x148] sm:$0xff] %v804
    %815 = vst [vmem:[#allocation3 + $0x150] sm:$0xff] %v805
    %816 = vst [vmem:[#allocation3 + $0x158] sm:$0xff] %v806
    %817 = vst [vmem:[#allocation3 + $0x160] sm:$0xff] %v807
    %v818 = vld [vmem:[%s1] sm:$0xff]
    %v819 = vld [vmem:[#allocation3] sm:$0xff]
    %v820 = vld [vmem:[#allocation3 + $0x8] sm:$0xff]
    %v821 = vld [vmem:[#allocation3 + $0x10] sm:$0xff]
    %v822 = vld [vmem:[#allocation3 + $0x18] sm:$0xff]
    %v823 = vld [vmem:[#allocation3 + $0x20] sm:$0xff]
    %v824 = vld [vmem:[#allocation3 + $0x28] sm:$0xff]
    %v825 = vld [vmem:[#allocation3 + $0x30] sm:$0xff]
    %v826 = vld [vmem:[#allocation3 + $0x38] sm:$0xff]
    %v827 = vld [vmem:[#allocation3 + $0x40] sm:$0xff]
    %v828 = vld [vmem:[#allocation3 + $0x48] sm:$0xff]
    %v829 = vld [vmem:[#allocation3 + $0x50] sm:$0xff]
    %v830 = vld [vmem:[#allocation3 + $0x58] sm:$0xff]
    %v831 = vld [vmem:[#allocation3 + $0x60] sm:$0xff]
    %v832 = vld [vmem:[#allocation3 + $0x68] sm:$0xff]
    %v833 = vld [vmem:[#allocation3 + $0x70] sm:$0xff]
    %v834 = vld [vmem:[#allocation3 + $0x78] sm:$0xff]
    %v835 = vld [vmem:[#allocation3 + $0x80] sm:$0xff]
    %v836 = vld [vmem:[#allocation3 + $0x88] sm:$0xff]
    %v837 = vld [vmem:[#allocation3 + $0x90] sm:$0xff]
    %v838 = vld [vmem:[#allocation3 + $0x98] sm:$0xff]
    %v839 = vld [vmem:[#allocation3 + $0xa0] sm:$0xff]
    %v840 = vld [vmem:[#allocation3 + $0xa8] sm:$0xff]
    %v841 = vld [vmem:[#allocation3 + $0xb0] sm:$0xff]
    %v842 = vld [vmem:[#allocation3 + $0xb8] sm:$0xff]
    %v843 = vld [vmem:[#allocation3 + $0xc0] sm:$0xff]
    %v844 = vld [vmem:[#allocation3 + $0xc8] sm:$0xff]
    %v845 = vld [vmem:[#allocation3 + $0xd0] sm:$0xff]
    %v846 = vld [vmem:[#allocation3 + $0xd8] sm:$0xff]
    %v847 = vld [vmem:[#allocation3 + $0xe0] sm:$0xff]
    %v848 = vld [vmem:[#allocation3 + $0xe8] sm:$0xff]
    %v849 = vld [vmem:[#allocation3 + $0xf0] sm:$0xff]
    %v850 = vld [vmem:[#allocation3 + $0xf8] sm:$0xff]
    %v851 = vld [vmem:[#allocation3 + $0x100] sm:$0xff]
    %v852 = vld [vmem:[#allocation3 + $0x108] sm:$0xff]
    %v853 = vld [vmem:[#allocation3 + $0x110] sm:$0xff]
    %v854 = vld [vmem:[#allocation3 + $0x118] sm:$0xff]
    %v855 = vld [vmem:[#allocation3 + $0x120] sm:$0xff]
    %v856 = vld [vmem:[#allocation3 + $0x128] sm:$0xff]
    %v857 = vld [vmem:[#allocation3 + $0x130] sm:$0xff]
    %v858 = vld [vmem:[#allocation3 + $0x138] sm:$0xff]
    %v859 = vld [vmem:[#allocation3 + $0x140] sm:$0xff]
    %v860 = vld [vmem:[#allocation3 + $0x148] sm:$0xff]
    %v861 = vld [vmem:[#allocation3 + $0x150] sm:$0xff]
    %v862 = vld [vmem:[#allocation3 + $0x158] sm:$0xff]
    %v863 = vld [vmem:[#allocation3 + $0x160] sm:$0xff]
    %v864 = vld [vmem:[%s2] sm:$0xff]
    %866 = vset.pattern.permute.xlu0 0
    %867 = vperm.xlu0 %866, %v864
    %v868 = vpop.permute.xlu0 %867
    %vm870 = vcmask 588800
    %v872 = vsel %vm870, %v818, 0
    %874 = vmatpush.msra.mxu0 0.0
    %875 = vmatpush.msra.mxu0 0.0
    %876 = vmatpush.msra.mxu0 0.0
    %877 = vmatpush.msra.mxu0 0.0
    %878 = vmatpush.msra.mxu0 0.0
    %879 = vmatpush.msra.mxu0 0.0
    %880 = vmatpush.msra.mxu0 0.0
    %881 = vmatpush.msra.mxu0 %v859
    %882 = vmatpush.msra.mxu0 %v854
    %883 = vmatpush.msra.mxu0 %v849
    %884 = vmatpush.msra.mxu0 %v844
    %885 = vmatpush.msra.mxu0 %v839
    %886 = vmatpush.msra.mxu0 %v834
    %887 = vmatpush.msra.mxu0 %v829
    %888 = vmatpush.msra.mxu0 %v824
    %889 = vmatpush.msra.mxu0 %v819
    %890 = vmatmul.f32.gmra.mxu0 %v872
    %v891 = vpop.f32.mrf.mxu0
    %v892 = vadd.f32 %v868, %v891
    %893 = vdwg.mxu0
    %894 = vmatpush.msra.mxu0 0.0
    %895 = vmatpush.msra.mxu0 0.0
    %896 = vmatpush.msra.mxu0 0.0
    %897 = vmatpush.msra.mxu0 0.0
    %898 = vmatpush.msra.mxu0 0.0
    %899 = vmatpush.msra.mxu0 0.0
    %900 = vmatpush.msra.mxu0 0.0
    %901 = vmatpush.msra.mxu0 %v860
    %902 = vmatpush.msra.mxu0 %v855
    %903 = vmatpush.msra.mxu0 %v850
    %904 = vmatpush.msra.mxu0 %v845
    %905 = vmatpush.msra.mxu0 %v840
    %906 = vmatpush.msra.mxu0 %v835
    %907 = vmatpush.msra.mxu0 %v830
    %908 = vmatpush.msra.mxu0 %v825
    %909 = vmatpush.msra.mxu0 %v820
    %910 = vmatmul.f32.gmra.mxu0 %v872
    %v911 = vpop.f32.mrf.mxu0
    %v912 = vadd.f32 %v868, %v911
    %913 = vdwg.mxu0
    %914 = vmatpush.msra.mxu0 0.0
    %915 = vmatpush.msra.mxu0 0.0
    %916 = vmatpush.msra.mxu0 0.0
    %917 = vmatpush.msra.mxu0 0.0
    %918 = vmatpush.msra.mxu0 0.0
    %919 = vmatpush.msra.mxu0 0.0
    %920 = vmatpush.msra.mxu0 0.0
    %921 = vmatpush.msra.mxu0 %v861
    %922 = vmatpush.msra.mxu0 %v856
    %923 = vmatpush.msra.mxu0 %v851
    %924 = vmatpush.msra.mxu0 %v846
    %925 = vmatpush.msra.mxu0 %v841
    %926 = vmatpush.msra.mxu0 %v836
    %927 = vmatpush.msra.mxu0 %v831
    %928 = vmatpush.msra.mxu0 %v826
    %929 = vmatpush.msra.mxu0 %v821
    %930 = vmatmul.f32.gmra.mxu0 %v872
    %v931 = vpop.f32.mrf.mxu0
    %v932 = vadd.f32 %v868, %v931
    %933 = vdwg.mxu0
    %934 = vmatpush.msra.mxu0 0.0
    %935 = vmatpush.msra.mxu0 0.0
    %936 = vmatpush.msra.mxu0 0.0
    %937 = vmatpush.msra.mxu0 0.0
    %938 = vmatpush.msra.mxu0 0.0
    %939 = vmatpush.msra.mxu0 0.0
    %940 = vmatpush.msra.mxu0 0.0
    %941 = vmatpush.msra.mxu0 %v862
    %942 = vmatpush.msra.mxu0 %v857
    %943 = vmatpush.msra.mxu0 %v852
    %944 = vmatpush.msra.mxu0 %v847
    %945 = vmatpush.msra.mxu0 %v842
    %946 = vmatpush.msra.mxu0 %v837
    %947 = vmatpush.msra.mxu0 %v832
    %948 = vmatpush.msra.mxu0 %v827
    %949 = vmatpush.msra.mxu0 %v822
    %950 = vmatmul.f32.gmra.mxu0 %v872
    %v951 = vpop.f32.mrf.mxu0
    %v952 = vadd.f32 %v868, %v951
    %953 = vdwg.mxu0
    %954 = vmatpush.msra.mxu0 0.0
    %955 = vmatpush.msra.mxu0 0.0
    %956 = vmatpush.msra.mxu0 0.0
    %957 = vmatpush.msra.mxu0 0.0
    %958 = vmatpush.msra.mxu0 0.0
    %959 = vmatpush.msra.mxu0 0.0
    %960 = vmatpush.msra.mxu0 0.0
    %961 = vmatpush.msra.mxu0 %v863
    %962 = vmatpush.msra.mxu0 %v858
    %963 = vmatpush.msra.mxu0 %v853
    %964 = vmatpush.msra.mxu0 %v848
    %965 = vmatpush.msra.mxu0 %v843
    %966 = vmatpush.msra.mxu0 %v838
    %967 = vmatpush.msra.mxu0 %v833
    %968 = vmatpush.msra.mxu0 %v828
    %969 = vmatpush.msra.mxu0 %v823
    %970 = vmatmul.f32.gmra.mxu0 %v872
    %v971 = vpop.f32.mrf.mxu0
    %v972 = vadd.f32 %v868, %v971
    %973 = vdwg.mxu0
    %v974 = vld [vmem:[%s7] sm:$0xff]
    %v975 = vld [vmem:[%s8] sm:$0xff]
    %v976 = vmul.f32 %v892, %v159
    %v977 = vmul.f32 %v912, %v160
    %v978 = vmul.f32 %v932, %v161
    %v979 = vmul.f32 %v952, %v162
    %v980 = vmul.f32 %v972, %v163
    %v981 = vadd.f32 %v976, %v977
    %v982 = vadd.f32 %v981, %v978
    %v983 = vadd.f32 %v982, %v979
    %v984 = vadd.f32 %v983, %v980
    %985 = vadd.xlane.f32.xlu0 %v984
    %v986 = vpop.xlane.xlu0 %985
    %v987 = vmul.f32 %v986, 0.001953125
    %v988 = vsub.f32 %v892, %v987
    %v989 = vsub.f32 %v912, %v987
    %v990 = vsub.f32 %v932, %v987
    %v991 = vsub.f32 %v952, %v987
    %v992 = vsub.f32 %v972, %v987
    %v993 = vmul.f32 %v988, %v159
    %v994 = vmul.f32 %v989, %v160
    %v995 = vmul.f32 %v990, %v161
    %v996 = vmul.f32 %v991, %v162
    %v997 = vmul.f32 %v992, %v163
    %v998 = vmul.f32 %v993, %v993
    %v999 = vmul.f32 %v994, %v994
    %v1000 = vmul.f32 %v995, %v995
    %v1001 = vmul.f32 %v996, %v996
    %v1002 = vmul.f32 %v997, %v997
    %v1003 = vadd.f32 %v998, %v999
    %v1004 = vadd.f32 %v1003, %v1000
    %v1005 = vadd.f32 %v1004, %v1001
    %v1006 = vadd.f32 %v1005, %v1002
    %1007 = vadd.xlane.f32.xlu0 %v1006
    %v1008 = vpop.xlane.xlu0 %1007
    %v1009 = vmul.f32 %v1008, 0.001953125
    %v1010 = vadd.f32 %v1009, 1e-05
    %v1011 = vrsqrt.pop %v1010
    %v1012 = vmul.f32 %v1011, %v1010
    %v1013 = vmul.f32 %v1012, %v1011
    %v1014 = vmul.f32 0.5, %v1013
    %v1015 = vsub.f32 1.5, %v1014
    %v1016 = vmul.f32 %v1011, %v1015
    %vm1017 = vweird.f32 %v1010
    %vm1018 = vweird.f32 %v1011
    %vm1019 = vmor %vm1017, %vm1018
    %v1020 = vsel %vm1019, %v1011, %v1016
    %v1021 = vmul.f32 %v1020, %v974
    %1023 = vset.pattern.permute.xlu0 0
    %1024 = vperm.xlu0 %1023, %v1021
    %v1025 = vpop.permute.xlu0 %1024
    %v1027 = vmul.f32 %v988, %v1025
    %v1028 = vmul.f32 %v989, %v1025
    %v1029 = vmul.f32 %v990, %v1025
    %v1030 = vmul.f32 %v991, %v1025
    %v1031 = vmul.f32 %v992, %v1025
    %1033 = vset.pattern.permute.xlu0 0
    %1034 = vperm.xlu0 %1033, %v975
    %v1035 = vpop.permute.xlu0 %1034
    %v1037 = vadd.f32 %v1027, %v1035
    %v1038 = vadd.f32 %v1028, %v1035
    %v1039 = vadd.f32 %v1029, %v1035
    %v1040 = vadd.f32 %v1030, %v1035
    %v1041 = vadd.f32 %v1031, %v1035
    %v1042 = vmax.f32 %v1037, 0.0
    %v1043 = vmax.f32 %v1038, 0.0
    %v1044 = vmax.f32 %v1039, 0.0
    %v1045 = vmax.f32 %v1040, 0.0
    %v1046 = vmax.f32 %v1041, 0.0
    %v1047 = vmul.f32 %v1042, %v159
    %v1048 = vmul.f32 %v1043, %v160
    %v1049 = vmul.f32 %v1044, %v161
    %v1050 = vmul.f32 %v1045, %v162
    %v1051 = vmul.f32 %v1046, %v163
    %1052 = vst [vmem:[#allocation2 + $0x8] sm:$0xff] %v1047
    %1053 = vst [vmem:[#allocation2 + $0x10] sm:$0xff] %v1048
    %1054 = vst [vmem:[#allocation2 + $0x18] sm:$0xff] %v1049
    %1055 = vst [vmem:[#allocation2 + $0x20] sm:$0xff] %v1050
    %1056 = vst [vmem:[#allocation2 + $0x28] sm:$0xff] %v1051
    %v1057 = vld [vmem:[#allocation2] sm:$0xff]
    %v1058 = vld [vmem:[#allocation2 + $0x8] sm:$0xff]
    %v1059 = vld [vmem:[#allocation2 + $0x10] sm:$0xff]
    %v1060 = vld [vmem:[#allocation2 + $0x18] sm:$0xff]
    %v1061 = vld [vmem:[#allocation2 + $0x20] sm:$0xff]
    %v1062 = vld [vmem:[#allocation2 + $0x28] sm:$0xff]
    %v1063 = vmul.f32 %v1057, %v335
    %v1064 = vmul.f32 %v1058, %v345
    %v1065 = vmul.f32 %v1059, %v346
    %v1066 = vmul.f32 %v1060, %v347
    %v1067 = vmul.f32 %v1061, %v348
    %v1068 = vmul.f32 %v1062, %v343
    %1075 = vrot.lane.b32.xlu0 %v1063, 17
    %v1076 = vpop.permute.xlu0 %1075
    %1077 = vrot.lane.b32.xlu0 %v1064, 17
    %v1078 = vpop.permute.xlu0 %1077
    %1079 = vrot.lane.b32.xlu0 %v1065, 17
    %v1080 = vpop.permute.xlu0 %1079
    %1081 = vrot.lane.b32.xlu0 %v1066, 17
    %v1082 = vpop.permute.xlu0 %1081
    %1083 = vrot.lane.b32.xlu0 %v1067, 17
    %v1084 = vpop.permute.xlu0 %1083
    %1085 = vrot.lane.b32.xlu0 %v1068, 17
    %v1086 = vpop.permute.xlu0 %1085
    %v1087 = vsel %vm379, %v1076, %v1078
    %v1088 = vsel %vm379, %v1078, %v1080
    %v1089 = vsel %vm379, %v1080, %v1082
    %v1090 = vsel %vm379, %v1082, %v1084
    %v1091 = vsel %vm379, %v1084, %v1086
    %1097 = vst [vmem:[#allocation3] sm:$0xff] %v1087
    %1098 = vst [vmem:[#allocation3 + $0x8] sm:$0xff] %v1088
    %1099 = vst [vmem:[#allocation3 + $0x10] sm:$0xff] %v1089
    %1100 = vst [vmem:[#allocation3 + $0x18] sm:$0xff] %v1090
    %1101 = vst [vmem:[#allocation3 + $0x20] sm:$0xff] %v1091
    %v1102 = vld [vmem:[#allocation2] sm:$0xff]
    %v1103 = vld [vmem:[#allocation2 + $0x8] sm:$0xff]
    %v1104 = vld [vmem:[#allocation2 + $0x10] sm:$0xff]
    %v1105 = vld [vmem:[#allocation2 + $0x18] sm:$0xff]
    %v1106 = vld [vmem:[#allocation2 + $0x20] sm:$0xff]
    %v1107 = vld [vmem:[#allocation2 + $0x28] sm:$0xff]
    %1114 = vrot.lane.b32.xlu0 %v1102, 16
    %v1115 = vpop.permute.xlu0 %1114
    %1116 = vrot.lane.b32.xlu0 %v1103, 16
    %v1117 = vpop.permute.xlu0 %1116
    %1118 = vrot.lane.b32.xlu0 %v1104, 16
    %v1119 = vpop.permute.xlu0 %1118
    %1120 = vrot.lane.b32.xlu0 %v1105, 16
    %v1121 = vpop.permute.xlu0 %1120
    %1122 = vrot.lane.b32.xlu0 %v1106, 16
    %v1123 = vpop.permute.xlu0 %1122
    %1124 = vrot.lane.b32.xlu0 %v1107, 16
    %v1125 = vpop.permute.xlu0 %1124
    %v1126 = vsel %vm210, %v1115, %v1117
    %v1127 = vsel %vm210, %v1117, %v1119
    %v1128 = vsel %vm210, %v1119, %v1121
    %v1129 = vsel %vm210, %v1121, %v1123
    %v1130 = vsel %vm210, %v1123, %v1125
    %1136 = vst [vmem:[#allocation3 + $0x28] sm:$0xff] %v1126
    %1137 = vst [vmem:[#allocation3 + $0x30] sm:$0xff] %v1127
    %1138 = vst [vmem:[#allocation3 + $0x38] sm:$0xff] %v1128
    %1139 = vst [vmem:[#allocation3 + $0x40] sm:$0xff] %v1129
    %1140 = vst [vmem:[#allocation3 + $0x48] sm:$0xff] %v1130
    %v1141 = vld [vmem:[#allocation2] sm:$0xff]
    %v1142 = vld [vmem:[#allocation2 + $0x8] sm:$0xff]
    %v1143 = vld [vmem:[#allocation2 + $0x10] sm:$0xff]
    %v1144 = vld [vmem:[#allocation2 + $0x18] sm:$0xff]
    %v1145 = vld [vmem:[#allocation2 + $0x20] sm:$0xff]
    %v1146 = vld [vmem:[#allocation2 + $0x28] sm:$0xff]
    %v1147 = vmul.f32 %v1141, %v446
    %v1148 = vmul.f32 %v1142, %v456
    %v1149 = vmul.f32 %v1143, %v457
    %v1150 = vmul.f32 %v1144, %v458
    %v1151 = vmul.f32 %v1145, %v459
    %v1152 = vmul.f32 %v1146, %v454
    %1159 = vrot.lane.b32.xlu0 %v1147, 15
    %v1160 = vpop.permute.xlu0 %1159
    %1161 = vrot.lane.b32.xlu0 %v1148, 15
    %v1162 = vpop.permute.xlu0 %1161
    %1163 = vrot.lane.b32.xlu0 %v1149, 15
    %v1164 = vpop.permute.xlu0 %1163
    %1165 = vrot.lane.b32.xlu0 %v1150, 15
    %v1166 = vpop.permute.xlu0 %1165
    %1167 = vrot.lane.b32.xlu0 %v1151, 15
    %v1168 = vpop.permute.xlu0 %1167
    %1169 = vrot.lane.b32.xlu0 %v1152, 15
    %v1170 = vpop.permute.xlu0 %1169
    %v1171 = vsel %vm490, %v1160, %v1162
    %v1172 = vsel %vm490, %v1162, %v1164
    %v1173 = vsel %vm490, %v1164, %v1166
    %v1174 = vsel %vm490, %v1166, %v1168
    %v1175 = vsel %vm490, %v1168, %v1170
    %1181 = vst [vmem:[#allocation3 + $0x50] sm:$0xff] %v1171
    %1182 = vst [vmem:[#allocation3 + $0x58] sm:$0xff] %v1172
    %1183 = vst [vmem:[#allocation3 + $0x60] sm:$0xff] %v1173
    %1184 = vst [vmem:[#allocation3 + $0x68] sm:$0xff] %v1174
    %1185 = vst [vmem:[#allocation3 + $0x70] sm:$0xff] %v1175
    %v1186 = vld [vmem:[#allocation2] sm:$0xff]
    %v1187 = vld [vmem:[#allocation2 + $0x8] sm:$0xff]
    %v1188 = vld [vmem:[#allocation2 + $0x10] sm:$0xff]
    %v1189 = vld [vmem:[#allocation2 + $0x18] sm:$0xff]
    %v1190 = vld [vmem:[#allocation2 + $0x20] sm:$0xff]
    %v1191 = vld [vmem:[#allocation2 + $0x28] sm:$0xff]
    %v1192 = vmul.f32 %v1186, %v513
    %v1193 = vmul.f32 %v1187, %v523
    %v1194 = vmul.f32 %v1188, %v524
    %v1195 = vmul.f32 %v1189, %v525
    %v1196 = vmul.f32 %v1190, %v526
    %v1197 = vmul.f32 %v1191, %v521
    %1204 = vrot.lane.b32.xlu0 %v1192, 1
    %v1205 = vpop.permute.xlu0 %1204
    %1206 = vrot.lane.b32.xlu0 %v1193, 1
    %v1207 = vpop.permute.xlu0 %1206
    %1208 = vrot.lane.b32.xlu0 %v1194, 1
    %v1209 = vpop.permute.xlu0 %1208
    %1210 = vrot.lane.b32.xlu0 %v1195, 1
    %v1211 = vpop.permute.xlu0 %1210
    %1212 = vrot.lane.b32.xlu0 %v1196, 1
    %v1213 = vpop.permute.xlu0 %1212
    %1214 = vrot.lane.b32.xlu0 %v1197, 1
    %v1215 = vpop.permute.xlu0 %1214
    %v1216 = vsel %vm557, %v1205, %v1207
    %v1217 = vsel %vm557, %v1207, %v1209
    %v1218 = vsel %vm557, %v1209, %v1211
    %v1219 = vsel %vm557, %v1211, %v1213
    %v1220 = vsel %vm557, %v1213, %v1215
    %1226 = vst [vmem:[#allocation3 + $0x78] sm:$0xff] %v1216
    %1227 = vst [vmem:[#allocation3 + $0x80] sm:$0xff] %v1217
    %1228 = vst [vmem:[#allocation3 + $0x88] sm:$0xff] %v1218
    %1229 = vst [vmem:[#allocation3 + $0x90] sm:$0xff] %v1219
    %1230 = vst [vmem:[#allocation3 + $0x98] sm:$0xff] %v1220
    %v1231 = vld [vmem:[#allocation2 + $0x8] sm:$0xff]
    %v1232 = vld [vmem:[#allocation2 + $0x10] sm:$0xff]
    %v1233 = vld [vmem:[#allocation2 + $0x18] sm:$0xff]
    %v1234 = vld [vmem:[#allocation2 + $0x20] sm:$0xff]
    %v1235 = vld [vmem:[#allocation2 + $0x28] sm:$0xff]
    %1236 = vst [vmem:[#allocation3 + $0xa0] sm:$0xff] %v1231
    %1237 = vst [vmem:[#allocation3 + $0xa8] sm:$0xff] %v1232
    %1238 = vst [vmem:[#allocation3 + $0xb0] sm:$0xff] %v1233
    %1239 = vst [vmem:[#allocation3 + $0xb8] sm:$0xff] %v1234
    %1240 = vst [vmem:[#allocation3 + $0xc0] sm:$0xff] %v1235
    %v1241 = vld [vmem:[#allocation2 + $0x8] sm:$0xff]
    %v1242 = vld [vmem:[#allocation2 + $0x10] sm:$0xff]
    %v1243 = vld [vmem:[#allocation2 + $0x18] sm:$0xff]
    %v1244 = vld [vmem:[#allocation2 + $0x20] sm:$0xff]
    %v1245 = vld [vmem:[#allocation2 + $0x28] sm:$0xff]
    %v1246 = vld [vmem:[#allocation2 + $0x30] sm:$0xff]
    %v1247 = vmul.f32 %v1241, %v590
    %v1248 = vmul.f32 %v1242, %v599
    %v1249 = vmul.f32 %v1243, %v600
    %v1250 = vmul.f32 %v1244, %v601
    %v1251 = vmul.f32 %v1245, %v602
    %v1252 = vmul.f32 %v1246, %v598
    %1259 = vrot.lane.b32.xlu0 %v1247, 127
    %v1260 = vpop.permute.xlu0 %1259
    %1261 = vrot.lane.b32.xlu0 %v1248, 127
    %v1262 = vpop.permute.xlu0 %1261
    %1263 = vrot.lane.b32.xlu0 %v1249, 127
    %v1264 = vpop.permute.xlu0 %1263
    %1265 = vrot.lane.b32.xlu0 %v1250, 127
    %v1266 = vpop.permute.xlu0 %1265
    %1267 = vrot.lane.b32.xlu0 %v1251, 127
    %v1268 = vpop.permute.xlu0 %1267
    %1269 = vrot.lane.b32.xlu0 %v1252, 127
    %v1270 = vpop.permute.xlu0 %1269
    %v1271 = vsel %vm522, %v1260, %v1262
    %v1272 = vsel %vm522, %v1262, %v1264
    %v1273 = vsel %vm522, %v1264, %v1266
    %v1274 = vsel %vm522, %v1266, %v1268
    %v1275 = vsel %vm522, %v1268, %v1270
    %1281 = vst [vmem:[#allocation3 + $0xc8] sm:$0xff] %v1271
    %1282 = vst [vmem:[#allocation3 + $0xd0] sm:$0xff] %v1272
    %1283 = vst [vmem:[#allocation3 + $0xd8] sm:$0xff] %v1273
    %1284 = vst [vmem:[#allocation3 + $0xe0] sm:$0xff] %v1274
    %1285 = vst [vmem:[#allocation3 + $0xe8] sm:$0xff] %v1275
    %v1286 = vld [vmem:[#allocation2 + $0x8] sm:$0xff]
    %v1287 = vld [vmem:[#allocation2 + $0x10] sm:$0xff]
    %v1288 = vld [vmem:[#allocation2 + $0x18] sm:$0xff]
    %v1289 = vld [vmem:[#allocation2 + $0x20] sm:$0xff]
    %v1290 = vld [vmem:[#allocation2 + $0x28] sm:$0xff]
    %v1291 = vld [vmem:[#allocation2 + $0x30] sm:$0xff]
    %v1292 = vmul.f32 %v1286, %v655
    %v1293 = vmul.f32 %v1287, %v664
    %v1294 = vmul.f32 %v1288, %v665
    %v1295 = vmul.f32 %v1289, %v666
    %v1296 = vmul.f32 %v1290, %v667
    %v1297 = vmul.f32 %v1291, %v663
    %1304 = vrot.lane.b32.xlu0 %v1292, 113
    %v1305 = vpop.permute.xlu0 %1304
    %1306 = vrot.lane.b32.xlu0 %v1293, 113
    %v1307 = vpop.permute.xlu0 %1306
    %1308 = vrot.lane.b32.xlu0 %v1294, 113
    %v1309 = vpop.permute.xlu0 %1308
    %1310 = vrot.lane.b32.xlu0 %v1295, 113
    %v1311 = vpop.permute.xlu0 %1310
    %1312 = vrot.lane.b32.xlu0 %v1296, 113
    %v1313 = vpop.permute.xlu0 %1312
    %1314 = vrot.lane.b32.xlu0 %v1297, 113
    %v1315 = vpop.permute.xlu0 %1314
    %v1316 = vsel %vm455, %v1305, %v1307
    %v1317 = vsel %vm455, %v1307, %v1309
    %v1318 = vsel %vm455, %v1309, %v1311
    %v1319 = vsel %vm455, %v1311, %v1313
    %v1320 = vsel %vm455, %v1313, %v1315
    %1326 = vst [vmem:[#allocation3 + $0xf0] sm:$0xff] %v1316
    %1327 = vst [vmem:[#allocation3 + $0xf8] sm:$0xff] %v1317
    %1328 = vst [vmem:[#allocation3 + $0x100] sm:$0xff] %v1318
    %1329 = vst [vmem:[#allocation3 + $0x108] sm:$0xff] %v1319
    %1330 = vst [vmem:[#allocation3 + $0x110] sm:$0xff] %v1320
    %v1331 = vld [vmem:[#allocation2 + $0x8] sm:$0xff]
    %v1332 = vld [vmem:[#allocation2 + $0x10] sm:$0xff]
    %v1333 = vld [vmem:[#allocation2 + $0x18] sm:$0xff]
    %v1334 = vld [vmem:[#allocation2 + $0x20] sm:$0xff]
    %v1335 = vld [vmem:[#allocation2 + $0x28] sm:$0xff]
    %v1336 = vld [vmem:[#allocation2 + $0x30] sm:$0xff]
    %1343 = vrot.lane.b32.xlu0 %v1331, 112
    %v1344 = vpop.permute.xlu0 %1343
    %1345 = vrot.lane.b32.xlu0 %v1332, 112
    %v1346 = vpop.permute.xlu0 %1345
    %1347 = vrot.lane.b32.xlu0 %v1333, 112
    %v1348 = vpop.permute.xlu0 %1347
    %1349 = vrot.lane.b32.xlu0 %v1334, 112
    %v1350 = vpop.permute.xlu0 %1349
    %1351 = vrot.lane.b32.xlu0 %v1335, 112
    %v1352 = vpop.permute.xlu0 %1351
    %1353 = vrot.lane.b32.xlu0 %v1336, 112
    %v1354 = vpop.permute.xlu0 %1353
    %v1355 = vsel %vm737, %v1344, %v1346
    %v1356 = vsel %vm737, %v1346, %v1348
    %v1357 = vsel %vm737, %v1348, %v1350
    %v1358 = vsel %vm737, %v1350, %v1352
    %v1359 = vsel %vm737, %v1352, %v1354
    %1365 = vst [vmem:[#allocation3 + $0x118] sm:$0xff] %v1355
    %1366 = vst [vmem:[#allocation3 + $0x120] sm:$0xff] %v1356
    %1367 = vst [vmem:[#allocation3 + $0x128] sm:$0xff] %v1357
    %1368 = vst [vmem:[#allocation3 + $0x130] sm:$0xff] %v1358
    %1369 = vst [vmem:[#allocation3 + $0x138] sm:$0xff] %v1359
    %v1370 = vld [vmem:[#allocation2 + $0x8] sm:$0xff]
    %v1371 = vld [vmem:[#allocation2 + $0x10] sm:$0xff]
    %v1372 = vld [vmem:[#allocation2 + $0x18] sm:$0xff]
    %v1373 = vld [vmem:[#allocation2 + $0x20] sm:$0xff]
    %v1374 = vld [vmem:[#allocation2 + $0x28] sm:$0xff]
    %v1375 = vld [vmem:[#allocation2 + $0x30] sm:$0xff]
    %v1376 = vmul.f32 %v1370, %v760
    %v1377 = vmul.f32 %v1371, %v769
    %v1378 = vmul.f32 %v1372, %v770
    %v1379 = vmul.f32 %v1373, %v771
    %v1380 = vmul.f32 %v1374, %v772
    %v1381 = vmul.f32 %v1375, %v768
    %1388 = vrot.lane.b32.xlu0 %v1376, 111
    %v1389 = vpop.permute.xlu0 %1388
    %1390 = vrot.lane.b32.xlu0 %v1377, 111
    %v1391 = vpop.permute.xlu0 %1390
    %1392 = vrot.lane.b32.xlu0 %v1378, 111
    %v1393 = vpop.permute.xlu0 %1392
    %1394 = vrot.lane.b32.xlu0 %v1379, 111
    %v1395 = vpop.permute.xlu0 %1394
    %1396 = vrot.lane.b32.xlu0 %v1380, 111
    %v1397 = vpop.permute.xlu0 %1396
    %1398 = vrot.lane.b32.xlu0 %v1381, 111
    %v1399 = vpop.permute.xlu0 %1398
    %v1400 = vsel %vm344, %v1389, %v1391
    %v1401 = vsel %vm344, %v1391, %v1393
    %v1402 = vsel %vm344, %v1393, %v1395
    %v1403 = vsel %vm344, %v1395, %v1397
    %v1404 = vsel %vm344, %v1397, %v1399
    %1410 = vst [vmem:[#allocation3 + $0x140] sm:$0xff] %v1400
    %1411 = vst [vmem:[#allocation3 + $0x148] sm:$0xff] %v1401
    %1412 = vst [vmem:[#allocation3 + $0x150] sm:$0xff] %v1402
    %1413 = vst [vmem:[#allocation3 + $0x158] sm:$0xff] %v1403
    %1414 = vst [vmem:[#allocation3 + $0x160] sm:$0xff] %v1404
    %v1415 = vld [vmem:[%s5] sm:$0xff]
    %v1416 = vld [vmem:[#allocation3] sm:$0xff]
    %v1417 = vld [vmem:[#allocation3 + $0x8] sm:$0xff]
    %v1418 = vld [vmem:[#allocation3 + $0x10] sm:$0xff]
    %v1419 = vld [vmem:[#allocation3 + $0x18] sm:$0xff]
    %v1420 = vld [vmem:[#allocation3 + $0x20] sm:$0xff]
    %v1421 = vld [vmem:[#allocation3 + $0x28] sm:$0xff]
    %v1422 = vld [vmem:[#allocation3 + $0x30] sm:$0xff]
    %v1423 = vld [vmem:[#allocation3 + $0x38] sm:$0xff]
    %v1424 = vld [vmem:[#allocation3 + $0x40] sm:$0xff]
    %v1425 = vld [vmem:[#allocation3 + $0x48] sm:$0xff]
    %v1426 = vld [vmem:[#allocation3 + $0x50] sm:$0xff]
    %v1427 = vld [vmem:[#allocation3 + $0x58] sm:$0xff]
    %v1428 = vld [vmem:[#allocation3 + $0x60] sm:$0xff]
    %v1429 = vld [vmem:[#allocation3 + $0x68] sm:$0xff]
    %v1430 = vld [vmem:[#allocation3 + $0x70] sm:$0xff]
    %v1431 = vld [vmem:[#allocation3 + $0x78] sm:$0xff]
    %v1432 = vld [vmem:[#allocation3 + $0x80] sm:$0xff]
    %v1433 = vld [vmem:[#allocation3 + $0x88] sm:$0xff]
    %v1434 = vld [vmem:[#allocation3 + $0x90] sm:$0xff]
    %v1435 = vld [vmem:[#allocation3 + $0x98] sm:$0xff]
    %v1436 = vld [vmem:[#allocation3 + $0xa0] sm:$0xff]
    %v1437 = vld [vmem:[#allocation3 + $0xa8] sm:$0xff]
    %v1438 = vld [vmem:[#allocation3 + $0xb0] sm:$0xff]
    %v1439 = vld [vmem:[#allocation3 + $0xb8] sm:$0xff]
    %v1440 = vld [vmem:[#allocation3 + $0xc0] sm:$0xff]
    %v1441 = vld [vmem:[#allocation3 + $0xc8] sm:$0xff]
    %v1442 = vld [vmem:[#allocation3 + $0xd0] sm:$0xff]
    %v1443 = vld [vmem:[#allocation3 + $0xd8] sm:$0xff]
    %v1444 = vld [vmem:[#allocation3 + $0xe0] sm:$0xff]
    %v1445 = vld [vmem:[#allocation3 + $0xe8] sm:$0xff]
    %v1446 = vld [vmem:[#allocation3 + $0xf0] sm:$0xff]
    %v1447 = vld [vmem:[#allocation3 + $0xf8] sm:$0xff]
    %v1448 = vld [vmem:[#allocation3 + $0x100] sm:$0xff]
    %v1449 = vld [vmem:[#allocation3 + $0x108] sm:$0xff]
    %v1450 = vld [vmem:[#allocation3 + $0x110] sm:$0xff]
    %v1451 = vld [vmem:[#allocation3 + $0x118] sm:$0xff]
    %v1452 = vld [vmem:[#allocation3 + $0x120] sm:$0xff]
    %v1453 = vld [vmem:[#allocation3 + $0x128] sm:$0xff]
    %v1454 = vld [vmem:[#allocation3 + $0x130] sm:$0xff]
    %v1455 = vld [vmem:[#allocation3 + $0x138] sm:$0xff]
    %v1456 = vld [vmem:[#allocation3 + $0x140] sm:$0xff]
    %v1457 = vld [vmem:[#allocation3 + $0x148] sm:$0xff]
    %v1458 = vld [vmem:[#allocation3 + $0x150] sm:$0xff]
    %v1459 = vld [vmem:[#allocation3 + $0x158] sm:$0xff]
    %v1460 = vld [vmem:[#allocation3 + $0x160] sm:$0xff]
    %v1461 = vld [vmem:[%s6] sm:$0xff]
    %1463 = vset.pattern.permute.xlu0 0
    %1464 = vperm.xlu0 %1463, %v1461
    %v1465 = vpop.permute.xlu0 %1464
    %v1468 = vsel %vm870, %v1415, 0
    %1470 = vmatpush.msra.mxu0 0.0
    %1471 = vmatpush.msra.mxu0 0.0
    %1472 = vmatpush.msra.mxu0 0.0
    %1473 = vmatpush.msra.mxu0 0.0
    %1474 = vmatpush.msra.mxu0 0.0
    %1475 = vmatpush.msra.mxu0 0.0
    %1476 = vmatpush.msra.mxu0 0.0
    %1477 = vmatpush.msra.mxu0 %v1456
    %1478 = vmatpush.msra.mxu0 %v1451
    %1479 = vmatpush.msra.mxu0 %v1446
    %1480 = vmatpush.msra.mxu0 %v1441
    %1481 = vmatpush.msra.mxu0 %v1436
    %1482 = vmatpush.msra.mxu0 %v1431
    %1483 = vmatpush.msra.mxu0 %v1426
    %1484 = vmatpush.msra.mxu0 %v1421
    %1485 = vmatpush.msra.mxu0 %v1416
    %1486 = vmatmul.f32.gmra.mxu0 %v1468
    %v1487 = vpop.f32.mrf.mxu0
    %v1488 = vadd.f32 %v1465, %v1487
    %1489 = vdwg.mxu0
    %1490 = vmatpush.msra.mxu0 0.0
    %1491 = vmatpush.msra.mxu0 0.0
    %1492 = vmatpush.msra.mxu0 0.0
    %1493 = vmatpush.msra.mxu0 0.0
    %1494 = vmatpush.msra.mxu0 0.0
    %1495 = vmatpush.msra.mxu0 0.0
    %1496 = vmatpush.msra.mxu0 0.0
    %1497 = vmatpush.msra.mxu0 %v1457
    %1498 = vmatpush.msra.mxu0 %v1452
    %1499 = vmatpush.msra.mxu0 %v1447
    %1500 = vmatpush.msra.mxu0 %v1442
    %1501 = vmatpush.msra.mxu0 %v1437
    %1502 = vmatpush.msra.mxu0 %v1432
    %1503 = vmatpush.msra.mxu0 %v1427
    %1504 = vmatpush.msra.mxu0 %v1422
    %1505 = vmatpush.msra.mxu0 %v1417
    %1506 = vmatmul.f32.gmra.mxu0 %v1468
    %v1507 = vpop.f32.mrf.mxu0
    %v1508 = vadd.f32 %v1465, %v1507
    %1509 = vdwg.mxu0
    %1510 = vmatpush.msra.mxu0 0.0
    %1511 = vmatpush.msra.mxu0 0.0
    %1512 = vmatpush.msra.mxu0 0.0
    %1513 = vmatpush.msra.mxu0 0.0
    %1514 = vmatpush.msra.mxu0 0.0
    %1515 = vmatpush.msra.mxu0 0.0
    %1516 = vmatpush.msra.mxu0 0.0
    %1517 = vmatpush.msra.mxu0 %v1458
    %1518 = vmatpush.msra.mxu0 %v1453
    %1519 = vmatpush.msra.mxu0 %v1448
    %1520 = vmatpush.msra.mxu0 %v1443
    %1521 = vmatpush.msra.mxu0 %v1438
    %1522 = vmatpush.msra.mxu0 %v1433
    %1523 = vmatpush.msra.mxu0 %v1428
    %1524 = vmatpush.msra.mxu0 %v1423
    %1525 = vmatpush.msra.mxu0 %v1418
    %1526 = vmatmul.f32.gmra.mxu0 %v1468
    %v1527 = vpop.f32.mrf.mxu0
    %v1528 = vadd.f32 %v1465, %v1527
    %1529 = vdwg.mxu0
    %1530 = vmatpush.msra.mxu0 0.0
    %1531 = vmatpush.msra.mxu0 0.0
    %1532 = vmatpush.msra.mxu0 0.0
    %1533 = vmatpush.msra.mxu0 0.0
    %1534 = vmatpush.msra.mxu0 0.0
    %1535 = vmatpush.msra.mxu0 0.0
    %1536 = vmatpush.msra.mxu0 0.0
    %1537 = vmatpush.msra.mxu0 %v1459
    %1538 = vmatpush.msra.mxu0 %v1454
    %1539 = vmatpush.msra.mxu0 %v1449
    %1540 = vmatpush.msra.mxu0 %v1444
    %1541 = vmatpush.msra.mxu0 %v1439
    %1542 = vmatpush.msra.mxu0 %v1434
    %1543 = vmatpush.msra.mxu0 %v1429
    %1544 = vmatpush.msra.mxu0 %v1424
    %1545 = vmatpush.msra.mxu0 %v1419
    %1546 = vmatmul.f32.gmra.mxu0 %v1468
    %v1547 = vpop.f32.mrf.mxu0
    %v1548 = vadd.f32 %v1465, %v1547
    %1549 = vdwg.mxu0
    %1550 = vmatpush.msra.mxu0 0.0
    %1551 = vmatpush.msra.mxu0 0.0
    %1552 = vmatpush.msra.mxu0 0.0
    %1553 = vmatpush.msra.mxu0 0.0
    %1554 = vmatpush.msra.mxu0 0.0
    %1555 = vmatpush.msra.mxu0 0.0
    %1556 = vmatpush.msra.mxu0 0.0
    %1557 = vmatpush.msra.mxu0 %v1460
    %1558 = vmatpush.msra.mxu0 %v1455
    %1559 = vmatpush.msra.mxu0 %v1450
    %1560 = vmatpush.msra.mxu0 %v1445
    %1561 = vmatpush.msra.mxu0 %v1440
    %1562 = vmatpush.msra.mxu0 %v1435
    %1563 = vmatpush.msra.mxu0 %v1430
    %1564 = vmatpush.msra.mxu0 %v1425
    %1565 = vmatpush.msra.mxu0 %v1420
    %1566 = vmatmul.f32.gmra.mxu0 %v1468
    %v1567 = vpop.f32.mrf.mxu0
    %v1568 = vadd.f32 %v1465, %v1567
    %1569 = vdwg.mxu0
    %v1570 = vld [vmem:[%s0] sm:$0xff]
    %v1574 = vrot.slane %v1508, 4
    %vm1575 = vcmask 1043456
    %v1576 = vsel %vm1575, %v1488, %v1574
    %1577 = vrot.lane.b32.xlu0 %v1576, 112
    %v1578 = vpop.permute.xlu0 %1577
    %1579 = vrot.lane.b32.xlu0 %v1528, 112
    %v1580 = vpop.permute.xlu0 %1579
    %v1581 = vrot.slane %v1578, 4
    %v1582 = vrot.slane %v1580, 4
    %v1583 = vsel %vm1575, %v1581, %v1582
    %v1584 = vsel %vm737, %v1578, %v1583
    %v1586 = vadd.f32 %v1570, %v1584
    %1587 = vst [vmem:[#allocation4] sm:$0xff] %v1586
    %v1588 = vld [vmem:[%s220] sm:$0xff]
    %v1591 = vrot.slane %v1548, 4
    %v1592 = vsel %vm1575, %v1528, %v1591
    %1593 = vrot.lane.b32.xlu0 %v1592, 80
    %v1594 = vpop.permute.xlu0 %1593
    %1595 = vrot.lane.b32.xlu0 %v1568, 80
    %v1596 = vpop.permute.xlu0 %1595
    %v1597 = vrot.slane %v1594, 4
    %v1598 = vrot.slane %v1596, 4
    %v1599 = vsel %vm1575, %v1597, %v1598
    %vm1600 = vcmask 654336
    %v1601 = vsel %vm1600, %v1594, %v1599
    %v1603 = vadd.f32 %v1588, %v1601
    %s1604 = scalar_lea.vmem [#allocation4], 8
    %1605 = vst [vmem:[%s1604] sm:$0xff] %v1603
    // Predicated region
    $region38: #{tpu_custom_call.1} parent=1 // pred_check
      _
    $region39: #{tpu_custom_call.1} parent=1 // pred_check_branch
      %1607 = sbr.rel (0) target = $region41
    $region40: #{tpu_custom_call.1} parent=1 // pred_region
      %1609 = vsyncadd [#allocation5], 0
      %s1610 = sshll.u32 [#allocation4], 4
      %s1611 = int_to_ptr.vmem [resolvable:$true] %s1610
      %s1612 = sshll.u32 %s9, 4
      %s1613 = int_to_ptr.hbm [resolvable:$true] %s1612
      %1618 = dma.vmem_to_hbm [thread:$0]  %s1611, 256, %s1613, [#allocation5], 128, 128, 8
    $region41: #{tpu_custom_call.1} parent=1 // pred_fallthru
      _
    // Predicated region
    $region42: #{tpu_custom_call.1} parent=1 // pred_check
      _
    $region43: #{tpu_custom_call.1} parent=1 // pred_check_branch
      %1620 = sbr.rel (0) target = $region45
    $region44: #{tpu_custom_call.1} parent=1 // pred_region
      %1622 = dma.done [#allocation5], 256
    $region45: #{tpu_custom_call.1} parent=1 // pred_fallthru
      _
    %1623 = vsyncpa [#allocation5], 1

</llo_original>
